<compile_context>
chip_gen: v7x
topology: tpu7x:2x2x1
jax: 0.10.0
libtpu: 0.0.40
codegen_flags: <defaults>
</compile_context>

<pallas_src>
import jax
import jax.numpy as jnp
from jax.experimental import pallas as pl
from jax.experimental.pallas import tpu as pltpu


# Row (sublane) tiles must be multiples of 8 (or the full dim);
# reduction (lane) tiles must be multiples of 128 (or the full dim).
_ROW_TILE_CANDIDATES = (256, 128, 64, 32, 16, 8)
_RED_TILE_CANDIDATES = (256, 128)


def _round_up(x, m):
    return ((x + m - 1) // m) * m


def _pick_tile(n, candidates):
    for t in candidates:
        if t <= n and n % t == 0:
            return t
    return n  # fall back to the full (un-tiled) dimension -- always layout-legal


def _layer1_fused_kernel(a_ref, x_ref, w1_ref, b1_ref, w2_ref, p_ref, acc_ref):
    """P[i] = relu((sum_k A[i,k] @ X[k]) @ W1 + b1) @ W2   (per row tile i)."""
    k = pl.program_id(1)

    @pl.when(k == 0)
    def _():
        acc_ref[...] = jnp.zeros_like(acc_ref)

    # A streamed from HBM as bf16 (exact: binary), up-cast in vregs, f32 acc.
    a = a_ref[...].astype(jnp.float32)
    acc_ref[...] += jnp.dot(a, x_ref[...], preferred_element_type=jnp.float32)

    @pl.when(k == pl.num_programs(1) - 1)
    def _():
        z = jnp.dot(acc_ref[...], w1_ref[...], preferred_element_type=jnp.float32)
        z = jnp.maximum(z + b1_ref[...], 0.0)
        # Fused layer-2 input projection (project-before-aggregate): the hidden
        # activation z never leaves VMEM/vregs.
        p = jnp.dot(z, w2_ref[...], preferred_element_type=jnp.float32)
        p_ref[...] = p.astype(p_ref.dtype)


def _layer2_agg_kernel(a_ref, p_ref, b2_ref, o_ref, acc_ref):
    """O[i] = (sum_k A[i,k] @ P[k]) + b2   (per row tile i)."""
    k = pl.program_id(1)

    @pl.when(k == 0)
    def _():
        acc_ref[...] = jnp.zeros_like(acc_ref)

    a = a_ref[...].astype(jnp.float32)
    acc_ref[...] += jnp.dot(a, p_ref[...], preferred_element_type=jnp.float32)

    @pl.when(k == pl.num_programs(1) - 1)
    def _():
        o_ref[...] = (acc_ref[...] + b2_ref[...]).astype(o_ref.dtype)


def _layer1_fused(adj_bf16, x, w1, b1_2d, w2_pad):
    n = adj_bf16.shape[0]
    f_in = x.shape[1]
    out_pad = w2_pad.shape[1]
    row_t = _pick_tile(n, _ROW_TILE_CANDIDATES)
    red_t = _pick_tile(n, _RED_TILE_CANDIDATES)

    return pl.pallas_call(
        _layer1_fused_kernel,
        out_shape=jax.ShapeDtypeStruct((n, out_pad), jnp.float32),
        grid_spec=pltpu.PrefetchScalarGridSpec(
            num_scalar_prefetch=0,
            grid=(n // row_t, n // red_t),           # (rows, reduction-last)
            in_specs=[
                pl.BlockSpec((row_t, red_t), lambda i, k: (i, k)),   # A tile
                pl.BlockSpec((red_t, f_in), lambda i, k: (k, 0)),    # X tile
                pl.BlockSpec(w1.shape, lambda i, k: (0, 0)),         # W1 resident
                pl.BlockSpec(b1_2d.shape, lambda i, k: (0, 0)),      # b1 resident
                pl.BlockSpec(w2_pad.shape, lambda i, k: (0, 0)),     # W2 resident
            ],
            out_specs=pl.BlockSpec((row_t, out_pad), lambda i, k: (i, 0)),
            scratch_shapes=[pltpu.VMEM((row_t, f_in), jnp.float32)],
        ),
        compiler_params=pltpu.CompilerParams(
            dimension_semantics=("parallel", "arbitrary")),
    )(adj_bf16, x, w1, b1_2d, w2_pad)


def _layer2_agg(adj_bf16, p, b2_2d):
    n = adj_bf16.shape[0]
    out_pad = p.shape[1]
    row_t = _pick_tile(n, _ROW_TILE_CANDIDATES)
    red_t = _pick_tile(n, _RED_TILE_CANDIDATES)

    return pl.pallas_call(
        _layer2_agg_kernel,
        out_shape=jax.ShapeDtypeStruct((n, out_pad), jnp.float32),
        grid_spec=pltpu.PrefetchScalarGridSpec(
            num_scalar_prefetch=0,
            grid=(n // row_t, n // red_t),
            in_specs=[
                pl.BlockSpec((row_t, red_t), lambda i, k: (i, k)),     # A tile
                pl.BlockSpec((red_t, out_pad), lambda i, k: (k, 0)),   # P tile
                pl.BlockSpec(b2_2d.shape, lambda i, k: (0, 0)),        # b2 resident
            ],
            out_specs=pl.BlockSpec((row_t, out_pad), lambda i, k: (i, 0)),
            scratch_shapes=[pltpu.VMEM((row_t, out_pad), jnp.float32)],
        ),
        compiler_params=pltpu.CompilerParams(
            dimension_semantics=("parallel", "arbitrary")),
    )(adj_bf16, p, b2_2d)


def net_forward(adj, features, params):
    """Net.forward: x = relu(layer1(g, feat)); x = layer2(g, x)."""
    w1_t, b1, w2_t, b2 = params
    out_dim = w2_t.shape[1]
    out_pad = _round_up(out_dim, 128)            # lane-dense stores

    # Zero-pad the narrow final projection to a 128-lane slab (exact; sliced off
    # at the end).  The hidden dim needs no padding: it never hits HBM.
    w2_p = jnp.pad(w2_t, ((0, 0), (0, out_pad - out_dim)))
    b2_p = jnp.pad(b2, (0, out_pad - out_dim)).reshape(1, out_pad)
    b1_2d = b1.reshape(1, -1)

    # Binary adjacency -> bf16 stream (exact for 0/1), f32 accumulation in-kernel.
    adj_bf16 = adj.astype(jnp.bfloat16)

    # Kernel 1:  P = relu((A @ X) @ W1 + b1) @ W2_pad
    p = _layer1_fused(adj_bf16, features, w1_t, b1_2d, w2_p)
    # Kernel 2:  O = A @ P + b2    (== (A @ relu(layer1)) @ W2 + b2)
    out = _layer2_agg(adj_bf16, p, b2_p)
    return out[:, :out_dim]


def init_params(key, in_dim, hidden_dim, out_dim):
    """Deterministic nn.Linear-style init (uniform(-1/sqrt(fan_in), ..))."""
    k1, k2, k3, k4 = jax.random.split(key, 4)
    lim1 = 1.0 / jnp.sqrt(in_dim)
    lim2 = 1.0 / jnp.sqrt(hidden_dim)
    # Stored pre-transposed: (F_in, F_out), matching x @ W.T + b.
    w1_t = jax.random.uniform(k1, (in_dim, hidden_dim), jnp.float32, -lim1, lim1)
    b1 = jax.random.uniform(k2, (hidden_dim,), jnp.float32, -lim1, lim1)
    w2_t = jax.random.uniform(k3, (hidden_dim, out_dim), jnp.float32, -lim2, lim2)
    b2 = jax.random.uniform(k4, (out_dim,), jnp.float32, -lim2, lim2)
    return (w1_t, b1, w2_t, b2)


if __name__ == "__main__":
    key = jax.random.PRNGKey(0)
    k_feat, k_adj, k_param = jax.random.split(key, 3)

    # Small graph, but big enough to exercise the tiled grid (2x2 of 256 tiles).
    N, IN_DIM, HIDDEN_DIM, OUT_DIM = 512, 8, 32, 4

    features = jax.random.normal(k_feat, (N, IN_DIM), jnp.float32)
    adj = (jax.random.uniform(k_adj, (N, N)) < 0.1).astype(jnp.float32)

    params = init_params(k_param, IN_DIM, HIDDEN_DIM, OUT_DIM)

    out = jax.jit(net_forward)(adj, features, params)
    out = jax.block_until_ready(out)

    # High-precision plain-JAX reference (same math, aggregate-then-project order).
    w1_t, b1, w2_t, b2 = params
    hp = jax.lax.Precision.HIGHEST
    agg1 = jnp.dot(adj, features, precision=hp)
    z = jnp.maximum(jnp.dot(agg1, w1_t, precision=hp) + b1, 0.0)
    agg2 = jnp.dot(adj, z, precision=hp)
    ref = jnp.dot(agg2, w2_t, precision=hp) + b2

    assert out.shape == (N, OUT_DIM)
    assert jnp.allclose(out, ref, atol=1e-2, rtol=1e-3), float(
        jnp.max(jnp.abs(out - ref)))

    print("KERNEL_OK")
</pallas_src>

<mosaic_0001>
module attributes {stable_mosaic.version = 11 : i64} {
  func.func @_layer1_fused_kernel(%arg0: i32, %arg1: i32, %arg2: memref<256x256xbf16, #tpu.memory_space<vmem>>, %arg3: memref<256x8xf32, #tpu.memory_space<vmem>>, %arg4: memref<8x32xf32, #tpu.memory_space<vmem>>, %arg5: memref<1x32xf32, #tpu.memory_space<vmem>>, %arg6: memref<32x128xf32, #tpu.memory_space<vmem>>, %arg7: memref<256x128xf32, #tpu.memory_space<vmem>>, %arg8: memref<256x8xf32, #tpu.memory_space<vmem>>) attributes {dimension_semantics = [#tpu.dimension_semantics<parallel>, #tpu.dimension_semantics<arbitrary>], iteration_bounds = array<i64: 2, 2>, scalar_prefetch = 0 : i64, scratch_operands = 1 : i64, tpu.core_type = #tpu.core_type<tc>, window_params = [{transform_indices = @transform_0, window_bounds = array<i64: 256, 256>}, {transform_indices = @transform_1, window_bounds = array<i64: 256, 8>}, {pipeline_mode = #tpu.pipeline_mode<synchronous>, transform_indices = @transform_2, window_bounds = array<i64: 8, 32>}, {pipeline_mode = #tpu.pipeline_mode<synchronous>, transform_indices = @transform_3, window_bounds = array<i64: 1, 32>}, {pipeline_mode = #tpu.pipeline_mode<synchronous>, transform_indices = @transform_4, window_bounds = array<i64: 32, 128>}, {transform_indices = @transform_5, window_bounds = array<i64: 256, 128>}]} {
    %c0_i32 = arith.constant 0 : i32
    %0 = arith.cmpi eq, %arg1, %c0_i32 : i32
    %1 = arith.extui %0 : i1 to i32
    %c0_i32_0 = arith.constant 0 : i32
    %2 = arith.cmpi ne, %1, %c0_i32_0 : i32
    scf.if %2 {
      %cst_9 = arith.constant 0.000000e+00 : f32
      %13 = vector.broadcast %cst_9 : f32 to vector<256x8xf32>
      %c0_10 = arith.constant 0 : index
      %c0_11 = arith.constant 0 : index
      %14 = vector.load %arg8[%c0_10, %c0_11] : memref<256x8xf32, #tpu.memory_space<vmem>>, vector<256x8xf32>
      tpu.vector_store %arg8[%c0_10, %c0_11], %13 {strides = array<i32>} : memref<256x8xf32, #tpu.memory_space<vmem>>, vector<256x8xf32>,
    } else {
    }
    %c0 = arith.constant 0 : index
    %c0_1 = arith.constant 0 : index
    %3 = vector.load %arg2[%c0, %c0_1] : memref<256x256xbf16, #tpu.memory_space<vmem>>, vector<256x256xbf16>
    %4 = arith.extf %3 : vector<256x256xbf16> to vector<256x256xf32>
    %c0_2 = arith.constant 0 : index
    %c0_3 = arith.constant 0 : index
    %5 = vector.load %arg8[%c0_2, %c0_3] : memref<256x8xf32, #tpu.memory_space<vmem>>, vector<256x8xf32>
    %c0_4 = arith.constant 0 : index
    %c0_5 = arith.constant 0 : index
    %6 = vector.load %arg3[%c0_4, %c0_5] : memref<256x8xf32, #tpu.memory_space<vmem>>, vector<256x8xf32>
    %cst = arith.constant dense<0.000000e+00> : vector<256x8xf32>
    %7 = tpu.matmul %4, %6, %cst {dimension_numbers = #tpu.dot_dimension_numbers<[1], [0], [0], [1], [0, 0, 1, 1], [], []>} : vector<256x256xf32>, vector<256x8xf32>, vector<256x8xf32> -> vector<256x8xf32>
    %8 = arith.addf %5, %7 : vector<256x8xf32>
    %c0_6 = arith.constant 0 : index
    %c0_7 = arith.constant 0 : index
    %9 = vector.load %arg8[%c0_6, %c0_7] : memref<256x8xf32, #tpu.memory_space<vmem>>, vector<256x8xf32>
    tpu.vector_store %arg8[%c0_6, %c0_7], %8 {strides = array<i32>} : memref<256x8xf32, #tpu.memory_space<vmem>>, vector<256x8xf32>,
    %c1_i32 = arith.constant 1 : i32
    %10 = arith.cmpi eq, %arg1, %c1_i32 : i32
    %11 = arith.extui %10 : i1 to i32
    %c0_i32_8 = arith.constant 0 : i32
    %12 = arith.cmpi ne, %11, %c0_i32_8 : i32
    scf.if %12 {
      %c0_9 = arith.constant 0 : index
      %c0_10 = arith.constant 0 : index
      %13 = vector.load %arg8[%c0_9, %c0_10] : memref<256x8xf32, #tpu.memory_space<vmem>>, vector<256x8xf32>
      %c0_11 = arith.constant 0 : index
      %c0_12 = arith.constant 0 : index
      %14 = vector.load %arg4[%c0_11, %c0_12] : memref<8x32xf32, #tpu.memory_space<vmem>>, vector<8x32xf32>
      %cst_13 = arith.constant dense<0.000000e+00> : vector<256x32xf32>
      %15 = tpu.matmul %13, %14, %cst_13 {dimension_numbers = #tpu.dot_dimension_numbers<[1], [0], [0], [1], [0, 0, 1, 1], [], []>} : vector<256x8xf32>, vector<8x32xf32>, vector<256x32xf32> -> vector<256x32xf32>
      %c0_14 = arith.constant 0 : index
      %c0_15 = arith.constant 0 : index
      %16 = vector.load %arg5[%c0_14, %c0_15] : memref<1x32xf32, #tpu.memory_space<vmem>>, vector<1x32xf32>
      %17 = vector.broadcast %16 : vector<1x32xf32> to vector<256x32xf32>
      %18 = arith.addf %15, %17 : vector<256x32xf32>
      %cst_16 = arith.constant 0.000000e+00 : f32
      %19 = vector.broadcast %cst_16 : f32 to vector<256x32xf32>
      %20 = arith.maximumf %18, %19 : vector<256x32xf32>
      %c0_17 = arith.constant 0 : index
      %c0_18 = arith.constant 0 : index
      %21 = vector.load %arg6[%c0_17, %c0_18] : memref<32x128xf32, #tpu.memory_space<vmem>>, vector<32x128xf32>
      %cst_19 = arith.constant dense<0.000000e+00> : vector<256x128xf32>
      %22 = tpu.matmul %20, %21, %cst_19 {dimension_numbers = #tpu.dot_dimension_numbers<[1], [0], [0], [1], [0, 0, 1, 1], [], []>} : vector<256x32xf32>, vector<32x128xf32>, vector<256x128xf32> -> vector<256x128xf32>
      %c0_20 = arith.constant 0 : index
      %c0_21 = arith.constant 0 : index
      %23 = vector.load %arg7[%c0_20, %c0_21] : memref<256x128xf32, #tpu.memory_space<vmem>>, vector<256x128xf32>
      tpu.vector_store %arg7[%c0_20, %c0_21], %22 {strides = array<i32>} : memref<256x128xf32, #tpu.memory_space<vmem>>, vector<256x128xf32>,
    } else {
    }
    return
  }
  func.func @transform_0(%arg0: i32, %arg1: i32) -> (i32, i32) {
    %c0_i32 = arith.constant 0 : i32
    return %arg0, %arg1 : i32, i32
  }
  func.func @transform_1(%arg0: i32, %arg1: i32) -> (i32, i32) {
    %c0_i32 = arith.constant 0 : i32
    %c0_i32_0 = arith.constant 0 : i32
    return %arg1, %c0_i32 : i32, i32
  }
  func.func @transform_2(%arg0: i32, %arg1: i32) -> (i32, i32) {
    %c0_i32 = arith.constant 0 : i32
    %c0_i32_0 = arith.constant 0 : i32
    %c0_i32_1 = arith.constant 0 : i32
    return %c0_i32, %c0_i32_0 : i32, i32
  }
  func.func @transform_3(%arg0: i32, %arg1: i32) -> (i32, i32) {
    %c0_i32 = arith.constant 0 : i32
    %c0_i32_0 = arith.constant 0 : i32
    %c0_i32_1 = arith.constant 0 : i32
    return %c0_i32, %c0_i32_0 : i32, i32
  }
  func.func @transform_4(%arg0: i32, %arg1: i32) -> (i32, i32) {
    %c0_i32 = arith.constant 0 : i32
    %c0_i32_0 = arith.constant 0 : i32
    %c0_i32_1 = arith.constant 0 : i32
    return %c0_i32, %c0_i32_0 : i32, i32
  }
  func.func @transform_5(%arg0: i32, %arg1: i32) -> (i32, i32) {
    %c0_i32 = arith.constant 0 : i32
    %c0_i32_0 = arith.constant 0 : i32
    return %arg0, %c0_i32 : i32, i32
  }
}

module attributes {stable_mosaic.version = 11 : i64} {
  func.func @_layer2_agg_kernel(%arg0: i32, %arg1: i32, %arg2: memref<256x256xbf16, #tpu.memory_space<vmem>>, %arg3: memref<256x128xf32, #tpu.memory_space<vmem>>, %arg4: memref<1x128xf32, #tpu.memory_space<vmem>>, %arg5: memref<256x128xf32, #tpu.memory_space<vmem>>, %arg6: memref<256x128xf32, #tpu.memory_space<vmem>>) attributes {dimension_semantics = [#tpu.dimension_semantics<parallel>, #tpu.dimension_semantics<arbitrary>], iteration_bounds = array<i64: 2, 2>, scalar_prefetch = 0 : i64, scratch_operands = 1 : i64, tpu.core_type = #tpu.core_type<tc>, window_params = [{transform_indices = @transform_0, window_bounds = array<i64: 256, 256>}, {transform_indices = @transform_1, window_bounds = array<i64: 256, 128>}, {pipeline_mode = #tpu.pipeline_mode<synchronous>, transform_indices = @transform_2, window_bounds = array<i64: 1, 128>}, {transform_indices = @transform_3, window_bounds = array<i64: 256, 128>}]} {
    %c0_i32 = arith.constant 0 : i32
    %0 = arith.cmpi eq, %arg1, %c0_i32 : i32
    %1 = arith.extui %0 : i1 to i32
    %c0_i32_0 = arith.constant 0 : i32
    %2 = arith.cmpi ne, %1, %c0_i32_0 : i32
    scf.if %2 {
      %cst_9 = arith.constant 0.000000e+00 : f32
      %13 = vector.broadcast %cst_9 : f32 to vector<256x128xf32>
      %c0_10 = arith.constant 0 : index
      %c0_11 = arith.constant 0 : index
      %14 = vector.load %arg6[%c0_10, %c0_11] : memref<256x128xf32, #tpu.memory_space<vmem>>, vector<256x128xf32>
      tpu.vector_store %arg6[%c0_10, %c0_11], %13 {strides = array<i32>} : memref<256x128xf32, #tpu.memory_space<vmem>>, vector<256x128xf32>,
    } else {
    }
    %c0 = arith.constant 0 : index
    %c0_1 = arith.constant 0 : index
    %3 = vector.load %arg2[%c0, %c0_1] : memref<256x256xbf16, #tpu.memory_space<vmem>>, vector<256x256xbf16>
    %4 = arith.extf %3 : vector<256x256xbf16> to vector<256x256xf32>
    %c0_2 = arith.constant 0 : index
    %c0_3 = arith.constant 0 : index
    %5 = vector.load %arg6[%c0_2, %c0_3] : memref<256x128xf32, #tpu.memory_space<vmem>>, vector<256x128xf32>
    %c0_4 = arith.constant 0 : index
    %c0_5 = arith.constant 0 : index
    %6 = vector.load %arg3[%c0_4, %c0_5] : memref<256x128xf32, #tpu.memory_space<vmem>>, vector<256x128xf32>
    %cst = arith.constant dense<0.000000e+00> : vector<256x128xf32>
    %7 = tpu.matmul %4, %6, %cst {dimension_numbers = #tpu.dot_dimension_numbers<[1], [0], [0], [1], [0, 0, 1, 1], [], []>} : vector<256x256xf32>, vector<256x128xf32>, vector<256x128xf32> -> vector<256x128xf32>
    %8 = arith.addf %5, %7 : vector<256x128xf32>
    %c0_6 = arith.constant 0 : index
    %c0_7 = arith.constant 0 : index
    %9 = vector.load %arg6[%c0_6, %c0_7] : memref<256x128xf32, #tpu.memory_space<vmem>>, vector<256x128xf32>
    tpu.vector_store %arg6[%c0_6, %c0_7], %8 {strides = array<i32>} : memref<256x128xf32, #tpu.memory_space<vmem>>, vector<256x128xf32>,
    %c1_i32 = arith.constant 1 : i32
    %10 = arith.cmpi eq, %arg1, %c1_i32 : i32
    %11 = arith.extui %10 : i1 to i32
    %c0_i32_8 = arith.constant 0 : i32
    %12 = arith.cmpi ne, %11, %c0_i32_8 : i32
    scf.if %12 {
      %c0_9 = arith.constant 0 : index
      %c0_10 = arith.constant 0 : index
      %13 = vector.load %arg6[%c0_9, %c0_10] : memref<256x128xf32, #tpu.memory_space<vmem>>, vector<256x128xf32>
      %c0_11 = arith.constant 0 : index
      %c0_12 = arith.constant 0 : index
      %14 = vector.load %arg4[%c0_11, %c0_12] : memref<1x128xf32, #tpu.memory_space<vmem>>, vector<1x128xf32>
      %15 = vector.broadcast %14 : vector<1x128xf32> to vector<256x128xf32>
      %16 = arith.addf %13, %15 : vector<256x128xf32>
      %c0_13 = arith.constant 0 : index
      %c0_14 = arith.constant 0 : index
      %17 = vector.load %arg5[%c0_13, %c0_14] : memref<256x128xf32, #tpu.memory_space<vmem>>, vector<256x128xf32>
      tpu.vector_store %arg5[%c0_13, %c0_14], %16 {strides = array<i32>} : memref<256x128xf32, #tpu.memory_space<vmem>>, vector<256x128xf32>,
    } else {
    }
    return
  }
  func.func @transform_0(%arg0: i32, %arg1: i32) -> (i32, i32) {
    %c0_i32 = arith.constant 0 : i32
    return %arg0, %arg1 : i32, i32
  }
  func.func @transform_1(%arg0: i32, %arg1: i32) -> (i32, i32) {
    %c0_i32 = arith.constant 0 : i32
    %c0_i32_0 = arith.constant 0 : i32
    return %arg1, %c0_i32 : i32, i32
  }
  func.func @transform_2(%arg0: i32, %arg1: i32) -> (i32, i32) {
    %c0_i32 = arith.constant 0 : i32
    %c0_i32_0 = arith.constant 0 : i32
    %c0_i32_1 = arith.constant 0 : i32
    return %c0_i32, %c0_i32_0 : i32, i32
  }
  func.func @transform_3(%arg0: i32, %arg1: i32) -> (i32, i32) {
    %c0_i32 = arith.constant 0 : i32
    %c0_i32_0 = arith.constant 0 : i32
    return %arg0, %c0_i32 : i32, i32
  }
}

</mosaic_0001>

<llo_original>
// kernel: net_forward.2
$region0: #{net_forward.2}
  #allocation0 [shape = 'u32[]', space=smem, size = 0x4, offset = 0x4, fixed_abs, tag = 'smem constant byte address 0x4 - core index']
  #allocation1 [shape = 'u32[144,128]{1,0:T(1,128)}', space=vmem, size = 0x12000, scoped, tag = 'internal scratch']
  #allocation2 [shape = 'f32[256,8]{1,0:T(8,128)}', space=vmem, size = 0x20000, scoped, tag = 'scratch operand']
  %s0 = inlined_call_operand.vmem [shape: bf16[512,512], index: 0, kind: input, shape index: {}]
  %s1 = inlined_call_operand.vmem [shape: f32[512,8], index: 1, kind: input, shape index: {}]
  %s2 = inlined_call_operand.vmem [shape: f32[8,32], index: 2, kind: input, shape index: {}]
  %s3 = inlined_call_operand.vmem [shape: f32[1,32], index: 3, kind: input, shape index: {}]
  %s4 = inlined_call_operand.vmem [shape: f32[32,128], index: 4, kind: input, shape index: {}]
  %s5 = inlined_call_operand.vmem [shape: f32[512,128], index: 5, kind: output, shape index: {}]
  %s6 = sld [smem:[#allocation0]]
  $region99: #{net_forward.2} parent=0
    _
  %s8 = ssub.s32 1, %s6
  %s9 = scalar_select 0, %s8, %s6
  $region1: #{net_forward.2} parent=0
    #allocation3 [shape = 'u8[262144]{0}', space=vmem, size = 0x40000, scoped, tag = 'input window, operand 0']
    loop: start=0, step=1, limit=6
    $region2: #{net_forward.2} parent=1 // loop_pre_header
      _
    $region3: #{net_forward.2} parent=1 // loop_header
      %s11 = sphi 0, %s15
      %p12 = scmp.ge.s32.totalorder %s11, 6
      %s18 = sphi 0, %s30
      %s19 = sphi 0, %s26
      %s20 = sphi 0, %s18
      %s21 = sphi 0, %s19
      %s22 = sphi 0, %s20
      %s23 = sphi 0, %s21
      %s35 = sphi 0, %s37
      %s38 = sphi 0, %s35
      %s39 = sphi 0, %s38
      %s55 = sphi 0, %s39
      %s61 = sphi 0, %s63
      %s64 = sphi 0, %s61
      %s65 = sphi 0, %s64
      %s81 = sphi 0, %s65
      %s85 = sphi 0, %s85
      %s87 = sphi 0, %s85
      %s88 = sphi 0, %s87
      %s102 = sphi 0, %s88
      %s106 = sphi 0, %s106
      %s108 = sphi 0, %s106
      %s109 = sphi 0, %s108
      %s123 = sphi 0, %s109
      %s127 = sphi 0, %s127
      %s129 = sphi 0, %s127
      %s130 = sphi 0, %s129
      %s144 = sphi 0, %s130
      %s150 = sphi 0, %s152
      %s153 = sphi 0, %s150
      %s154 = sphi 0, %s153
      %s170 = sphi 0, %s154
    $region4: #{net_forward.2} parent=1 // loop_header_branch
      %14 = sbr.rel (%p12) target = $region8
    $region5: #{net_forward.2} parent=1 // loop_body
      %s16 = ssub.s32 %s11, 1
      %s17 = ssub.s32 %s11, 2
      %s24 = sadd.s32 1, %s19
      %p25 = scmp.ge.s32.totalorder %s24, 2
      %s26 = scalar_select %p25, 0, %s24
      %s27 = sadd.s32 1, %s18
      %s28 = scalar_select %p25, %s27, %s18
      %p29 = scmp.ge.s32.totalorder %s28, 2
      %s30 = scalar_select %p29, 0, %s28
      %s31 = ssub.s32 %s18, %s30
      %s32 = ssub.s32 %s19, %s26
      %s33 = sor.u32 %s31, %s32
      %p34 = scmp.eq.s32.totalorder %s33, 0
      %s36 = sadd.s32 %s35, 1
      %s37 = scalar_select %p34, %s35, %s36
      %p40 = pneg %p34
      %p41 = scmp.eq.s32.totalorder %s11, 3
      %p42 = por %p40, %p41
      %p43 = scmp.ne.s32.totalorder %s35, %s38
      %p44 = scmp.eq.s32.totalorder %s11, 0
      %p45 = por %p43, %p44
      %p46 = scmp.ne.s32.totalorder %s35, %s38
      %p47 = scmp.eq.s32.totalorder %s16, 3
      %p48 = por %p46, %p47
      %p49 = scmp.ne.s32.totalorder %s38, %s39
      %p50 = scmp.eq.s32.totalorder %s16, 0
      %p51 = por %p49, %p50
      %p52 = scmp.ne.s32.totalorder %s38, %s39
      %p53 = scmp.eq.s32.totalorder %s17, 3
      %p54 = por %p52, %p53
      %p56 = scmp.ne.s32.totalorder %s39, %s55
      %p57 = scmp.eq.s32.totalorder %s17, 0
      %p58 = por %p56, %p57
      %s59 = ssub.s32 %s19, %s26
      %p60 = scmp.eq.s32.totalorder %s59, 0
      %s62 = sadd.s32 %s61, 1
      %s63 = scalar_select %p60, %s61, %s62
      %p66 = pneg %p60
      %p67 = scmp.eq.s32.totalorder %s11, 3
      %p68 = por %p66, %p67
      %p69 = scmp.ne.s32.totalorder %s61, %s64
      %p70 = scmp.eq.s32.totalorder %s11, 0
      %p71 = por %p69, %p70
      %p72 = scmp.ne.s32.totalorder %s61, %s64
      %p73 = scmp.eq.s32.totalorder %s16, 3
      %p74 = por %p72, %p73
      %p75 = scmp.ne.s32.totalorder %s64, %s65
      %p76 = scmp.eq.s32.totalorder %s16, 0
      %p77 = por %p75, %p76
      %p78 = scmp.ne.s32.totalorder %s64, %s65
      %p79 = scmp.eq.s32.totalorder %s17, 3
      %p80 = por %p78, %p79
      %p82 = scmp.ne.s32.totalorder %s65, %s81
      %p83 = scmp.eq.s32.totalorder %s17, 0
      %p84 = por %p82, %p83
      %s86 = sadd.s32 %s85, 1
      %p89 = scmp.eq.s32.totalorder %s11, 3
      %p90 = scmp.ne.s32.totalorder %s85, %s87
      %p91 = scmp.eq.s32.totalorder %s11, 0
      %p92 = por %p90, %p91
      %p93 = scmp.ne.s32.totalorder %s85, %s87
      %p94 = scmp.eq.s32.totalorder %s16, 3
      %p95 = por %p93, %p94
      %p96 = scmp.ne.s32.totalorder %s87, %s88
      %p97 = scmp.eq.s32.totalorder %s16, 0
      %p98 = por %p96, %p97
      %p99 = scmp.ne.s32.totalorder %s87, %s88
      %p100 = scmp.eq.s32.totalorder %s17, 3
      %p101 = por %p99, %p100
      %p103 = scmp.ne.s32.totalorder %s88, %s102
      %p104 = scmp.eq.s32.totalorder %s17, 0
      %p105 = por %p103, %p104
      %s107 = sadd.s32 %s106, 1
      %p110 = scmp.eq.s32.totalorder %s11, 3
      %p111 = scmp.ne.s32.totalorder %s106, %s108
      %p112 = scmp.eq.s32.totalorder %s11, 0
      %p113 = por %p111, %p112
      %p114 = scmp.ne.s32.totalorder %s106, %s108
      %p115 = scmp.eq.s32.totalorder %s16, 3
      %p116 = por %p114, %p115
      %p117 = scmp.ne.s32.totalorder %s108, %s109
      %p118 = scmp.eq.s32.totalorder %s16, 0
      %p119 = por %p117, %p118
      %p120 = scmp.ne.s32.totalorder %s108, %s109
      %p121 = scmp.eq.s32.totalorder %s17, 3
      %p122 = por %p120, %p121
      %p124 = scmp.ne.s32.totalorder %s109, %s123
      %p125 = scmp.eq.s32.totalorder %s17, 0
      %p126 = por %p124, %p125
      %s128 = sadd.s32 %s127, 1
      %p131 = scmp.eq.s32.totalorder %s11, 3
      %p132 = scmp.ne.s32.totalorder %s127, %s129
      %p133 = scmp.eq.s32.totalorder %s11, 0
      %p134 = por %p132, %p133
      %p135 = scmp.ne.s32.totalorder %s127, %s129
      %p136 = scmp.eq.s32.totalorder %s16, 3
      %p137 = por %p135, %p136
      %p138 = scmp.ne.s32.totalorder %s129, %s130
      %p139 = scmp.eq.s32.totalorder %s16, 0
      %p140 = por %p138, %p139
      %p141 = scmp.ne.s32.totalorder %s129, %s130
      %p142 = scmp.eq.s32.totalorder %s17, 3
      %p143 = por %p141, %p142
      %p145 = scmp.ne.s32.totalorder %s130, %s144
      %p146 = scmp.eq.s32.totalorder %s17, 0
      %p147 = por %p145, %p146
      %s148 = ssub.s32 %s18, %s30
      %p149 = scmp.eq.s32.totalorder %s148, 0
      %s151 = sadd.s32 %s150, 1
      %s152 = scalar_select %p149, %s150, %s151
      %p155 = pneg %p149
      %p156 = scmp.eq.s32.totalorder %s11, 3
      %p157 = por %p155, %p156
      %p158 = scmp.ne.s32.totalorder %s150, %s153
      %p159 = scmp.eq.s32.totalorder %s11, 0
      %p160 = por %p158, %p159
      %p161 = scmp.ne.s32.totalorder %s150, %s153
      %p162 = scmp.eq.s32.totalorder %s16, 3
      %p163 = por %p161, %p162
      %p164 = scmp.ne.s32.totalorder %s153, %s154
      %p165 = scmp.eq.s32.totalorder %s16, 0
      %p166 = por %p164, %p165
      %p167 = scmp.ne.s32.totalorder %s153, %s154
      %p168 = scmp.eq.s32.totalorder %s17, 3
      %p169 = por %p167, %p168
      %p171 = scmp.ne.s32.totalorder %s154, %s170
      %p172 = scmp.eq.s32.totalorder %s17, 0
      %p173 = por %p171, %p172
      %p174 = scmp.le.s32.totalorder 1, %s11
      %p175 = scmp.lt.s32.totalorder %s11, 5
      %p176 = pnand %p174, %p175
      %p177 = pneg %p176
      // Predicated region
      $region9: #{net_forward.2} parent=5 // pred_check
        _
      $region10: #{net_forward.2} parent=5 // pred_check_branch
        %179 = sbr.rel (%p176) target = $region12
      $region11: #{net_forward.2} parent=5 // pred_region
        %s180 = ssub.s32 %s11, 1
        // Predicated region
        $region13: #{net_forward.2} parent=11 // pred_check
          %p181 = pneg %p98
        $region14: #{net_forward.2} parent=11 // pred_check_branch
          %183 = sbr.rel (%p181) target = $region16
        $region15: #{net_forward.2} parent=11 // pred_region
          _
        $region16: #{net_forward.2} parent=11 // pred_fallthru
          _
        // Predicated region
        $region17: #{net_forward.2} parent=11 // pred_check
          %p184 = pneg %p119
        $region18: #{net_forward.2} parent=11 // pred_check_branch
          %186 = sbr.rel (%p184) target = $region20
        $region19: #{net_forward.2} parent=11 // pred_region
          _
        $region20: #{net_forward.2} parent=11 // pred_fallthru
          _
        // Predicated region
        $region21: #{net_forward.2} parent=11 // pred_check
          %p187 = pneg %p140
        $region22: #{net_forward.2} parent=11 // pred_check_branch
          %189 = sbr.rel (%p187) target = $region24
        $region23: #{net_forward.2} parent=11 // pred_region
          _
        $region24: #{net_forward.2} parent=11 // pred_fallthru
          _
      $region12: #{net_forward.2} parent=5 // pred_fallthru
        _
      %p190 = scmp.lt.s32.totalorder %s11, 4
      // Predicated region
      $region25: #{net_forward.2} parent=5 // pred_check
        %p191 = pneg %p190
      $region26: #{net_forward.2} parent=5 // pred_check_branch
        %193 = sbr.rel (%p191) target = $region28
      $region27: #{net_forward.2} parent=5 // pred_region
        // Predicated region
        $region29: #{net_forward.2} parent=27 // pred_check
          %p194 = pneg %p45
        $region30: #{net_forward.2} parent=27 // pred_check_branch
          %196 = sbr.rel (%p194) target = $region32
        $region31: #{net_forward.2} parent=27 // pred_region
          %s197 = sand.u32 %s35, 1
          %s198 = sand.u32 %s35, 1
          %s199 = smul.addr %s198, 256
          %s200 = scalar_lea.vmem [#allocation3], %s199
          %s201 = smul.u32 32, %s18
          %s202 = smul.u32 2, %s19
          %s203 = smul.addr %s201, 4
          %s204 = sadd.s32 %s202, %s203
          %s205 = smul.addr %s204, 4
          %s206 = scalar_lea.vmem %s0, %s205
          // Predicated region
          $region33: #{net_forward.2} parent=31 // pred_check
            _
          $region34: #{net_forward.2} parent=31 // pred_check_branch
            %208 = sbr.rel (0) target = $region36
          $region35: #{net_forward.2} parent=31 // pred_region
            // Predicated region
            $region37: #{net_forward.2} parent=35 // pred_check
              _
            $region38: #{net_forward.2} parent=35 // pred_check_branch
              %210 = sbr.rel (0) target = $region40
            $region39: #{net_forward.2} parent=35 // pred_region
              // Predicated region
              $region52: #{net_forward.2} parent=39 // pred_check
                _
              $region53: #{net_forward.2} parent=39 // pred_check_branch
                %287 = sbr.rel (0) target = $region55
              $region54: #{net_forward.2} parent=39 // pred_region
                loop: start=0, step=1, limit=1
                $region56: #{net_forward.2} parent=54 // loop_pre_header
                  _
                $region57: #{net_forward.2} parent=54 // loop_header
                  %s289 = sphi 0, %s293
                  %p290 = scmp.ge.s32.totalorder %s289, 1
                  %s294 = sphi %s206, %s206
                  %s295 = sphi %s200, %s200
                $region58: #{net_forward.2} parent=54 // loop_header_branch
                  %292 = sbr.rel (%p290) target = $region62
                $region59: #{net_forward.2} parent=54 // loop_body
                  %v296 = vld [vmem:[%s294] sm:$0xff]
                  %297 = vst [vmem:[%s295] sm:$0xff] %v296
                  %v298 = vld [vmem:[%s294 + $0x10] sm:$0xff]
                  %299 = vst [vmem:[%s295 + $0x8] sm:$0xff] %v298
                  %v300 = vld [vmem:[%s294 + $0x20] sm:$0xff]
                  %301 = vst [vmem:[%s295 + $0x10] sm:$0xff] %v300
                  %v302 = vld [vmem:[%s294 + $0x30] sm:$0xff]
                  %303 = vst [vmem:[%s295 + $0x18] sm:$0xff] %v302
                  %v304 = vld [vmem:[%s294 + $0x40] sm:$0xff]
                  %305 = vst [vmem:[%s295 + $0x20] sm:$0xff] %v304
                  %v306 = vld [vmem:[%s294 + $0x50] sm:$0xff]
                  %307 = vst [vmem:[%s295 + $0x28] sm:$0xff] %v306
                  %v308 = vld [vmem:[%s294 + $0x60] sm:$0xff]
                  %309 = vst [vmem:[%s295 + $0x30] sm:$0xff] %v308
                  %v310 = vld [vmem:[%s294 + $0x70] sm:$0xff]
                  %311 = vst [vmem:[%s295 + $0x38] sm:$0xff] %v310
                  %v312 = vld [vmem:[%s294 + $0x80] sm:$0xff]
                  %313 = vst [vmem:[%s295 + $0x40] sm:$0xff] %v312
                  %v314 = vld [vmem:[%s294 + $0x90] sm:$0xff]
                  %315 = vst [vmem:[%s295 + $0x48] sm:$0xff] %v314
                  %v316 = vld [vmem:[%s294 + $0xa0] sm:$0xff]
                  %317 = vst [vmem:[%s295 + $0x50] sm:$0xff] %v316
                  %v318 = vld [vmem:[%s294 + $0xb0] sm:$0xff]
                  %319 = vst [vmem:[%s295 + $0x58] sm:$0xff] %v318
                  %v320 = vld [vmem:[%s294 + $0xc0] sm:$0xff]
                  %321 = vst [vmem:[%s295 + $0x60] sm:$0xff] %v320
                  %v322 = vld [vmem:[%s294 + $0xd0] sm:$0xff]
                  %323 = vst [vmem:[%s295 + $0x68] sm:$0xff] %v322
                  %v324 = vld [vmem:[%s294 + $0xe0] sm:$0xff]
                  %325 = vst [vmem:[%s295 + $0x70] sm:$0xff] %v324
                  %v326 = vld [vmem:[%s294 + $0xf0] sm:$0xff]
                  %327 = vst [vmem:[%s295 + $0x78] sm:$0xff] %v326
                  %v328 = vld [vmem:[%s294 + $0x100] sm:$0xff]
                  %329 = vst [vmem:[%s295 + $0x80] sm:$0xff] %v328
                  %v330 = vld [vmem:[%s294 + $0x110] sm:$0xff]
                  %331 = vst [vmem:[%s295 + $0x88] sm:$0xff] %v330
                  %v332 = vld [vmem:[%s294 + $0x120] sm:$0xff]
                  %333 = vst [vmem:[%s295 + $0x90] sm:$0xff] %v332
                  %v334 = vld [vmem:[%s294 + $0x130] sm:$0xff]
                  %335 = vst [vmem:[%s295 + $0x98] sm:$0xff] %v334
                  %v336 = vld [vmem:[%s294 + $0x140] sm:$0xff]
                  %337 = vst [vmem:[%s295 + $0xa0] sm:$0xff] %v336
                  %v338 = vld [vmem:[%s294 + $0x150] sm:$0xff]
                  %339 = vst [vmem:[%s295 + $0xa8] sm:$0xff] %v338
                  %v340 = vld [vmem:[%s294 + $0x160] sm:$0xff]
                  %341 = vst [vmem:[%s295 + $0xb0] sm:$0xff] %v340
                  %v342 = vld [vmem:[%s294 + $0x170] sm:$0xff]
                  %343 = vst [vmem:[%s295 + $0xb8] sm:$0xff] %v342
                  %v344 = vld [vmem:[%s294 + $0x180] sm:$0xff]
                  %345 = vst [vmem:[%s295 + $0xc0] sm:$0xff] %v344
                  %v346 = vld [vmem:[%s294 + $0x190] sm:$0xff]
                  %347 = vst [vmem:[%s295 + $0xc8] sm:$0xff] %v346
                  %v348 = vld [vmem:[%s294 + $0x1a0] sm:$0xff]
                  %349 = vst [vmem:[%s295 + $0xd0] sm:$0xff] %v348
                  %v350 = vld [vmem:[%s294 + $0x1b0] sm:$0xff]
                  %351 = vst [vmem:[%s295 + $0xd8] sm:$0xff] %v350
                  %v352 = vld [vmem:[%s294 + $0x1c0] sm:$0xff]
                  %353 = vst [vmem:[%s295 + $0xe0] sm:$0xff] %v352
                  %v354 = vld [vmem:[%s294 + $0x1d0] sm:$0xff]
                  %355 = vst [vmem:[%s295 + $0xe8] sm:$0xff] %v354
                  %v356 = vld [vmem:[%s294 + $0x1e0] sm:$0xff]
                  %357 = vst [vmem:[%s295 + $0xf0] sm:$0xff] %v356
                  %v358 = vld [vmem:[%s294 + $0x1f0] sm:$0xff]
                  %359 = vst [vmem:[%s295 + $0xf8] sm:$0xff] %v358
                $region60: #{net_forward.2} parent=54 // loop_footer
                  %s293 = sadd.s32 1, %s289
                $region61: #{net_forward.2} parent=54 // loop_footer_branch
                  %288 = sbr.rel target = $region57
                $region62: #{net_forward.2} parent=54 // loop_exit
                  _
              $region55: #{net_forward.2} parent=39 // pred_fallthru
                _
              // Predicated region
              $region63: #{net_forward.2} parent=39 // pred_check
                _
              $region64: #{net_forward.2} parent=39 // pred_check_branch
                %361 = sbr.rel target = $region66
              $region65: #{net_forward.2} parent=39 // pred_region
                _
              $region66: #{net_forward.2} parent=39 // pred_fallthru
                _
            $region40: #{net_forward.2} parent=35 // pred_fallthru
              _
            // Predicated region
            $region41: #{net_forward.2} parent=35 // pred_check
              _
            $region42: #{net_forward.2} parent=35 // pred_check_branch
              %212 = sbr.rel target = $region44
            $region43: #{net_forward.2} parent=35 // pred_region
              loop: start=0, step=1, limit=1
              $region45: #{net_forward.2} parent=43 // loop_pre_header
                _
              $region46: #{net_forward.2} parent=43 // loop_header
                %s215 = sphi 0, %s219
                %p216 = scmp.ge.s32.totalorder %s215, 1
                %s220 = sphi %s206, %s206
                %s221 = sphi %s200, %s200
              $region47: #{net_forward.2} parent=43 // loop_header_branch
                %218 = sbr.rel (%p216) target = $region51
              $region48: #{net_forward.2} parent=43 // loop_body
                %v222 = vld [vmem:[%s220] sm:$0xff]
                %223 = vst [vmem:[%s221] sm:$0xff] %v222
                %v224 = vld [vmem:[%s220 + $0x10] sm:$0xff]
                %225 = vst [vmem:[%s221 + $0x8] sm:$0xff] %v224
                %v226 = vld [vmem:[%s220 + $0x20] sm:$0xff]
                %227 = vst [vmem:[%s221 + $0x10] sm:$0xff] %v226
                %v228 = vld [vmem:[%s220 + $0x30] sm:$0xff]
                %229 = vst [vmem:[%s221 + $0x18] sm:$0xff] %v228
                %v230 = vld [vmem:[%s220 + $0x40] sm:$0xff]
                %231 = vst [vmem:[%s221 + $0x20] sm:$0xff] %v230
                %v232 = vld [vmem:[%s220 + $0x50] sm:$0xff]
                %233 = vst [vmem:[%s221 + $0x28] sm:$0xff] %v232
                %v234 = vld [vmem:[%s220 + $0x60] sm:$0xff]
                %235 = vst [vmem:[%s221 + $0x30] sm:$0xff] %v234
                %v236 = vld [vmem:[%s220 + $0x70] sm:$0xff]
                %237 = vst [vmem:[%s221 + $0x38] sm:$0xff] %v236
                %v238 = vld [vmem:[%s220 + $0x80] sm:$0xff]
                %239 = vst [vmem:[%s221 + $0x40] sm:$0xff] %v238
                %v240 = vld [vmem:[%s220 + $0x90] sm:$0xff]
                %241 = vst [vmem:[%s221 + $0x48] sm:$0xff] %v240
                %v242 = vld [vmem:[%s220 + $0xa0] sm:$0xff]
                %243 = vst [vmem:[%s221 + $0x50] sm:$0xff] %v242
                %v244 = vld [vmem:[%s220 + $0xb0] sm:$0xff]
                %245 = vst [vmem:[%s221 + $0x58] sm:$0xff] %v244
                %v246 = vld [vmem:[%s220 + $0xc0] sm:$0xff]
                %247 = vst [vmem:[%s221 + $0x60] sm:$0xff] %v246
                %v248 = vld [vmem:[%s220 + $0xd0] sm:$0xff]
                %249 = vst [vmem:[%s221 + $0x68] sm:$0xff] %v248
                %v250 = vld [vmem:[%s220 + $0xe0] sm:$0xff]
                %251 = vst [vmem:[%s221 + $0x70] sm:$0xff] %v250
                %v252 = vld [vmem:[%s220 + $0xf0] sm:$0xff]
                %253 = vst [vmem:[%s221 + $0x78] sm:$0xff] %v252
                %v254 = vld [vmem:[%s220 + $0x100] sm:$0xff]
                %255 = vst [vmem:[%s221 + $0x80] sm:$0xff] %v254
                %v256 = vld [vmem:[%s220 + $0x110] sm:$0xff]
                %257 = vst [vmem:[%s221 + $0x88] sm:$0xff] %v256
                %v258 = vld [vmem:[%s220 + $0x120] sm:$0xff]
                %259 = vst [vmem:[%s221 + $0x90] sm:$0xff] %v258
                %v260 = vld [vmem:[%s220 + $0x130] sm:$0xff]
                %261 = vst [vmem:[%s221 + $0x98] sm:$0xff] %v260
                %v262 = vld [vmem:[%s220 + $0x140] sm:$0xff]
                %263 = vst [vmem:[%s221 + $0xa0] sm:$0xff] %v262
                %v264 = vld [vmem:[%s220 + $0x150] sm:$0xff]
                %265 = vst [vmem:[%s221 + $0xa8] sm:$0xff] %v264
                %v266 = vld [vmem:[%s220 + $0x160] sm:$0xff]
                %267 = vst [vmem:[%s221 + $0xb0] sm:$0xff] %v266
                %v268 = vld [vmem:[%s220 + $0x170] sm:$0xff]
                %269 = vst [vmem:[%s221 + $0xb8] sm:$0xff] %v268
                %v270 = vld [vmem:[%s220 + $0x180] sm:$0xff]
                %271 = vst [vmem:[%s221 + $0xc0] sm:$0xff] %v270
                %v272 = vld [vmem:[%s220 + $0x190] sm:$0xff]
                %273 = vst [vmem:[%s221 + $0xc8] sm:$0xff] %v272
                %v274 = vld [vmem:[%s220 + $0x1a0] sm:$0xff]
                %275 = vst [vmem:[%s221 + $0xd0] sm:$0xff] %v274
                %v276 = vld [vmem:[%s220 + $0x1b0] sm:$0xff]
                %277 = vst [vmem:[%s221 + $0xd8] sm:$0xff] %v276
                %v278 = vld [vmem:[%s220 + $0x1c0] sm:$0xff]
                %279 = vst [vmem:[%s221 + $0xe0] sm:$0xff] %v278
                %v280 = vld [vmem:[%s220 + $0x1d0] sm:$0xff]
                %281 = vst [vmem:[%s221 + $0xe8] sm:$0xff] %v280
                %v282 = vld [vmem:[%s220 + $0x1e0] sm:$0xff]
                %283 = vst [vmem:[%s221 + $0xf0] sm:$0xff] %v282
                %v284 = vld [vmem:[%s220 + $0x1f0] sm:$0xff]
                %285 = vst [vmem:[%s221 + $0xf8] sm:$0xff] %v284
              $region49: #{net_forward.2} parent=43 // loop_footer
                %s219 = sadd.s32 1, %s215
              $region50: #{net_forward.2} parent=43 // loop_footer_branch
                %214 = sbr.rel target = $region46
              $region51: #{net_forward.2} parent=43 // loop_exit
                _
            $region44: #{net_forward.2} parent=35 // pred_fallthru
              _
          $region36: #{net_forward.2} parent=31 // pred_fallthru
            _
          %362 = vnop
        $region32: #{net_forward.2} parent=27 // pred_fallthru
          _
        // Predicated region
        $region67: #{net_forward.2} parent=27 // pred_check
          %p363 = pneg %p71
        $region68: #{net_forward.2} parent=27 // pred_check_branch
          %365 = sbr.rel (%p363) target = $region70
        $region69: #{net_forward.2} parent=27 // pred_region
          %s366 = smul.u32 32, %s19
          %p367 = scmp.lt.s32.totalorder %s366, 63
          %s368 = scalar_select %p367, %s366, 63
          %s369 = smul.addr %s368, 8
          %s370 = scalar_lea.vmem %s1, %s369
          %s371 = smul.u32 32, %s19
        $region70: #{net_forward.2} parent=27 // pred_fallthru
          _
      $region28: #{net_forward.2} parent=5 // pred_fallthru
        _
      %p372 = scmp.le.s32.totalorder 1, %s11
      %p373 = scmp.lt.s32.totalorder %s11, 5
      %p374 = pnand %p372, %p373
      %p375 = pneg %p374
      // Predicated region
      $region71: #{net_forward.2} parent=5 // pred_check
        _
      $region72: #{net_forward.2} parent=5 // pred_check_branch
        %377 = sbr.rel (%p374) target = $region74
      $region73: #{net_forward.2} parent=5 // pred_region
        %s378 = ssub.s32 %s11, 1
        %s379 = sand.u32 %s38, 1
        %s380 = sand.u32 %s38, 1
        %s381 = smul.addr %s380, 256
        %s382 = scalar_lea.vmem [#allocation3], %s381
        // Predicated region
        $region75: #{net_forward.2} parent=73 // pred_check
          %p383 = pneg %p51
        $region76: #{net_forward.2} parent=73 // pred_check_branch
          %385 = sbr.rel (%p383) target = $region78
        $region77: #{net_forward.2} parent=73 // pred_region
          _
        $region78: #{net_forward.2} parent=73 // pred_fallthru
          _
        %s386 = sand.u32 %s38, 1
        %s387 = sand.u32 %s38, 1
        %s388 = smul.addr %s387, 256
        %s389 = scalar_lea.vmem [#allocation3], %s388
        %p390 = pneg %p51
        %p391 = pneg %p48
        %s392 = smul.u32 32, %s21
        %p393 = scmp.lt.s32.totalorder %s392, 63
        %s394 = scalar_select %p393, %s392, 63
        %s395 = smul.addr %s394, 8
        %s396 = scalar_lea.vmem %s1, %s395
        %p397 = pneg %p77
        %p398 = pneg %p74
        %p399 = pneg %p98
        %p400 = pneg %p95
        %p401 = pneg %p119
        %p402 = pneg %p116
        %p403 = pneg %p140
        %p404 = pneg %p137
        %p405 = pneg %p166
        %p406 = pneg %p163
        %s407 = smul.u32 32, %s20
        %p408 = scmp.lt.s32.totalorder %s407, 63
        %s409 = scalar_select %p408, %s407, 63
        %s410 = smul.addr %s409, 8
        %s411 = scalar_lea.vmem %s5, %s410
        %s412 = smul.u32 32, %s20
        %s413 = smul.u32 2, %s21
        %s414 = smul.u32 32, %s21
        %p415 = scmp.lt.s32.totalorder %s414, 63
        %s416 = scalar_select %p415, %s414, 63
        %s417 = smul.addr %s416, 8
        %s418 = scalar_lea.vmem %s1, %s417
        %s419 = smul.u32 32, %s21
        %s420 = smul.u32 32, %s20
        %p421 = scmp.lt.s32.totalorder %s420, 63
        %s422 = scalar_select %p421, %s420, 63
        %s423 = smul.addr %s422, 8
        %s424 = scalar_lea.vmem %s5, %s423
        %s425 = smul.u32 32, %s20
        %p426 = scmp.eq.s32.totalorder %s21, 0
        // Predicated region
        $region79: #{net_forward.2} parent=73 // pred_check
          %p427 = pneg %p426
        $region80: #{net_forward.2} parent=73 // pred_check_branch
          %429 = sbr.rel (%p427) target = $region82
        $region81: #{net_forward.2} parent=73 // pred_region
          %vm430 = vcmask 64512
          %431 = vst.msk [vmem:[#allocation2] sm:$0xff] %vm430, 0.0
          %432 = vst.msk [vmem:[#allocation2 + $0x8] sm:$0xff] %vm430, 0.0
          %433 = vst.msk [vmem:[#allocation2 + $0x10] sm:$0xff] %vm430, 0.0
          %434 = vst.msk [vmem:[#allocation2 + $0x18] sm:$0xff] %vm430, 0.0
          %435 = vst.msk [vmem:[#allocation2 + $0x20] sm:$0xff] %vm430, 0.0
          %436 = vst.msk [vmem:[#allocation2 + $0x28] sm:$0xff] %vm430, 0.0
          %437 = vst.msk [vmem:[#allocation2 + $0x30] sm:$0xff] %vm430, 0.0
          %438 = vst.msk [vmem:[#allocation2 + $0x38] sm:$0xff] %vm430, 0.0
          %439 = vst.msk [vmem:[#allocation2 + $0x40] sm:$0xff] %vm430, 0.0
          %440 = vst.msk [vmem:[#allocation2 + $0x48] sm:$0xff] %vm430, 0.0
          %441 = vst.msk [vmem:[#allocation2 + $0x50] sm:$0xff] %vm430, 0.0
          %442 = vst.msk [vmem:[#allocation2 + $0x58] sm:$0xff] %vm430, 0.0
          %443 = vst.msk [vmem:[#allocation2 + $0x60] sm:$0xff] %vm430, 0.0
          %444 = vst.msk [vmem:[#allocation2 + $0x68] sm:$0xff] %vm430, 0.0
          %445 = vst.msk [vmem:[#allocation2 + $0x70] sm:$0xff] %vm430, 0.0
          %446 = vst.msk [vmem:[#allocation2 + $0x78] sm:$0xff] %vm430, 0.0
          %447 = vst.msk [vmem:[#allocation2 + $0x80] sm:$0xff] %vm430, 0.0
          %448 = vst.msk [vmem:[#allocation2 + $0x88] sm:$0xff] %vm430, 0.0
          %449 = vst.msk [vmem:[#allocation2 + $0x90] sm:$0xff] %vm430, 0.0
          %450 = vst.msk [vmem:[#allocation2 + $0x98] sm:$0xff] %vm430, 0.0
          %451 = vst.msk [vmem:[#allocation2 + $0xa0] sm:$0xff] %vm430, 0.0
          %452 = vst.msk [vmem:[#allocation2 + $0xa8] sm:$0xff] %vm430, 0.0
          %453 = vst.msk [vmem:[#allocation2 + $0xb0] sm:$0xff] %vm430, 0.0
          %454 = vst.msk [vmem:[#allocation2 + $0xb8] sm:$0xff] %vm430, 0.0
          %455 = vst.msk [vmem:[#allocation2 + $0xc0] sm:$0xff] %vm430, 0.0
          %456 = vst.msk [vmem:[#allocation2 + $0xc8] sm:$0xff] %vm430, 0.0
          %457 = vst.msk [vmem:[#allocation2 + $0xd0] sm:$0xff] %vm430, 0.0
          %458 = vst.msk [vmem:[#allocation2 + $0xd8] sm:$0xff] %vm430, 0.0
          %459 = vst.msk [vmem:[#allocation2 + $0xe0] sm:$0xff] %vm430, 0.0
          %460 = vst.msk [vmem:[#allocation2 + $0xe8] sm:$0xff] %vm430, 0.0
          %461 = vst.msk [vmem:[#allocation2 + $0xf0] sm:$0xff] %vm430, 0.0
          %462 = vst.msk [vmem:[#allocation2 + $0xf8] sm:$0xff] %vm430, 0.0
        $region82: #{net_forward.2} parent=73 // pred_fallthru
          _
        %v463 = vld [vmem:[%s382] sm:$0xff]
        %v464 = vld [vmem:[%s382 + $0x8] sm:$0xff]
        %v465 = vld [vmem:[%s382 + $0x10] sm:$0xff]
        %v466 = vld [vmem:[%s382 + $0x18] sm:$0xff]
        %v467 = vld [vmem:[%s382 + $0x20] sm:$0xff]
        %v468 = vld [vmem:[%s382 + $0x28] sm:$0xff]
        %v469 = vld [vmem:[%s382 + $0x30] sm:$0xff]
        %v470 = vld [vmem:[%s382 + $0x38] sm:$0xff]
        %v471 = vld [vmem:[%s382 + $0x40] sm:$0xff]
        %v472 = vld [vmem:[%s382 + $0x48] sm:$0xff]
        %v473 = vld [vmem:[%s382 + $0x50] sm:$0xff]
        %v474 = vld [vmem:[%s382 + $0x58] sm:$0xff]
        %v475 = vld [vmem:[%s382 + $0x60] sm:$0xff]
        %v476 = vld [vmem:[%s382 + $0x68] sm:$0xff]
        %v477 = vld [vmem:[%s382 + $0x70] sm:$0xff]
        %v478 = vld [vmem:[%s382 + $0x78] sm:$0xff]
        %v479 = vld [vmem:[%s382 + $0x80] sm:$0xff]
        %v480 = vld [vmem:[%s382 + $0x88] sm:$0xff]
        %v481 = vld [vmem:[%s382 + $0x90] sm:$0xff]
        %v482 = vld [vmem:[%s382 + $0x98] sm:$0xff]
        %v483 = vld [vmem:[%s382 + $0xa0] sm:$0xff]
        %v484 = vld [vmem:[%s382 + $0xa8] sm:$0xff]
        %v485 = vld [vmem:[%s382 + $0xb0] sm:$0xff]
        %v486 = vld [vmem:[%s382 + $0xb8] sm:$0xff]
        %v487 = vld [vmem:[%s382 + $0xc0] sm:$0xff]
        %v488 = vld [vmem:[%s382 + $0xc8] sm:$0xff]
        %v489 = vld [vmem:[%s382 + $0xd0] sm:$0xff]
        %v490 = vld [vmem:[%s382 + $0xd8] sm:$0xff]
        %v491 = vld [vmem:[%s382 + $0xe0] sm:$0xff]
        %v492 = vld [vmem:[%s382 + $0xe8] sm:$0xff]
        %v493 = vld [vmem:[%s382 + $0xf0] sm:$0xff]
        %v494 = vld [vmem:[%s382 + $0xf8] sm:$0xff]
        %v495 = vunpack.c.l.bf16 %v463
        %v496 = vunpack.c.h.bf16 %v463
        %v497 = vunpack.c.l.bf16 %v464
        %v498 = vunpack.c.h.bf16 %v464
        %v499 = vunpack.c.l.bf16 %v465
        %v500 = vunpack.c.h.bf16 %v465
        %v501 = vunpack.c.l.bf16 %v466
        %v502 = vunpack.c.h.bf16 %v466
        %v503 = vunpack.c.l.bf16 %v467
        %v504 = vunpack.c.h.bf16 %v467
        %v505 = vunpack.c.l.bf16 %v468
        %v506 = vunpack.c.h.bf16 %v468
        %v507 = vunpack.c.l.bf16 %v469
        %v508 = vunpack.c.h.bf16 %v469
        %v509 = vunpack.c.l.bf16 %v470
        %v510 = vunpack.c.h.bf16 %v470
        %v511 = vunpack.c.l.bf16 %v471
        %v512 = vunpack.c.h.bf16 %v471
        %v513 = vunpack.c.l.bf16 %v472
        %v514 = vunpack.c.h.bf16 %v472
        %v515 = vunpack.c.l.bf16 %v473
        %v516 = vunpack.c.h.bf16 %v473
        %v517 = vunpack.c.l.bf16 %v474
        %v518 = vunpack.c.h.bf16 %v474
        %v519 = vunpack.c.l.bf16 %v475
        %v520 = vunpack.c.h.bf16 %v475
        %v521 = vunpack.c.l.bf16 %v476
        %v522 = vunpack.c.h.bf16 %v476
        %v523 = vunpack.c.l.bf16 %v477
        %v524 = vunpack.c.h.bf16 %v477
        %v525 = vunpack.c.l.bf16 %v478
        %v526 = vunpack.c.h.bf16 %v478
        %v527 = vunpack.c.l.bf16 %v479
        %v528 = vunpack.c.h.bf16 %v479
        %v529 = vunpack.c.l.bf16 %v480
        %v530 = vunpack.c.h.bf16 %v480
        %v531 = vunpack.c.l.bf16 %v481
        %v532 = vunpack.c.h.bf16 %v481
        %v533 = vunpack.c.l.bf16 %v482
        %v534 = vunpack.c.h.bf16 %v482
        %v535 = vunpack.c.l.bf16 %v483
        %v536 = vunpack.c.h.bf16 %v483
        %v537 = vunpack.c.l.bf16 %v484
        %v538 = vunpack.c.h.bf16 %v484
        %v539 = vunpack.c.l.bf16 %v485
        %v540 = vunpack.c.h.bf16 %v485
        %v541 = vunpack.c.l.bf16 %v486
        %v542 = vunpack.c.h.bf16 %v486
        %v543 = vunpack.c.l.bf16 %v487
        %v544 = vunpack.c.h.bf16 %v487
        %v545 = vunpack.c.l.bf16 %v488
        %v546 = vunpack.c.h.bf16 %v488
        %v547 = vunpack.c.l.bf16 %v489
        %v548 = vunpack.c.h.bf16 %v489
        %v549 = vunpack.c.l.bf16 %v490
        %v550 = vunpack.c.h.bf16 %v490
        %v551 = vunpack.c.l.bf16 %v491
        %v552 = vunpack.c.h.bf16 %v491
        %v553 = vunpack.c.l.bf16 %v492
        %v554 = vunpack.c.h.bf16 %v492
        %v555 = vunpack.c.l.bf16 %v493
        %v556 = vunpack.c.h.bf16 %v493
        %v557 = vunpack.c.l.bf16 %v494
        %v558 = vunpack.c.h.bf16 %v494
        %v559 = vld [vmem:[#allocation2] sm:$0xff]
        %v560 = vld [vmem:[#allocation2 + $0x8] sm:$0xff]
        %v561 = vld [vmem:[#allocation2 + $0x10] sm:$0xff]
        %v562 = vld [vmem:[#allocation2 + $0x18] sm:$0xff]
        %v563 = vld [vmem:[#allocation2 + $0x20] sm:$0xff]
        %v564 = vld [vmem:[#allocation2 + $0x28] sm:$0xff]
        %v565 = vld [vmem:[#allocation2 + $0x30] sm:$0xff]
        %v566 = vld [vmem:[#allocation2 + $0x38] sm:$0xff]
        %v567 = vld [vmem:[#allocation2 + $0x40] sm:$0xff]
        %v568 = vld [vmem:[#allocation2 + $0x48] sm:$0xff]
        %v569 = vld [vmem:[#allocation2 + $0x50] sm:$0xff]
        %v570 = vld [vmem:[#allocation2 + $0x58] sm:$0xff]
        %v571 = vld [vmem:[#allocation2 + $0x60] sm:$0xff]
        %v572 = vld [vmem:[#allocation2 + $0x68] sm:$0xff]
        %v573 = vld [vmem:[#allocation2 + $0x70] sm:$0xff]
        %v574 = vld [vmem:[#allocation2 + $0x78] sm:$0xff]
        %v575 = vld [vmem:[#allocation2 + $0x80] sm:$0xff]
        %v576 = vld [vmem:[#allocation2 + $0x88] sm:$0xff]
        %v577 = vld [vmem:[#allocation2 + $0x90] sm:$0xff]
        %v578 = vld [vmem:[#allocation2 + $0x98] sm:$0xff]
        %v579 = vld [vmem:[#allocation2 + $0xa0] sm:$0xff]
        %v580 = vld [vmem:[#allocation2 + $0xa8] sm:$0xff]
        %v581 = vld [vmem:[#allocation2 + $0xb0] sm:$0xff]
        %v582 = vld [vmem:[#allocation2 + $0xb8] sm:$0xff]
        %v583 = vld [vmem:[#allocation2 + $0xc0] sm:$0xff]
        %v584 = vld [vmem:[#allocation2 + $0xc8] sm:$0xff]
        %v585 = vld [vmem:[#allocation2 + $0xd0] sm:$0xff]
        %v586 = vld [vmem:[#allocation2 + $0xd8] sm:$0xff]
        %v587 = vld [vmem:[#allocation2 + $0xe0] sm:$0xff]
        %v588 = vld [vmem:[#allocation2 + $0xe8] sm:$0xff]
        %v589 = vld [vmem:[#allocation2 + $0xf0] sm:$0xff]
        %v590 = vld [vmem:[#allocation2 + $0xf8] sm:$0xff]
        %v591 = vld [vmem:[%s418] sm:$0xff]
        %v592 = vld [vmem:[%s418 + $0x8] sm:$0xff]
        %v593 = vld [vmem:[%s418 + $0x10] sm:$0xff]
        %v594 = vld [vmem:[%s418 + $0x18] sm:$0xff]
        %v595 = vld [vmem:[%s418 + $0x20] sm:$0xff]
        %v596 = vld [vmem:[%s418 + $0x28] sm:$0xff]
        %v597 = vld [vmem:[%s418 + $0x30] sm:$0xff]
        %v598 = vld [vmem:[%s418 + $0x38] sm:$0xff]
        %v599 = vld [vmem:[%s418 + $0x40] sm:$0xff]
        %v600 = vld [vmem:[%s418 + $0x48] sm:$0xff]
        %v601 = vld [vmem:[%s418 + $0x50] sm:$0xff]
        %v602 = vld [vmem:[%s418 + $0x58] sm:$0xff]
        %v603 = vld [vmem:[%s418 + $0x60] sm:$0xff]
        %v604 = vld [vmem:[%s418 + $0x68] sm:$0xff]
        %v605 = vld [vmem:[%s418 + $0x70] sm:$0xff]
        %v606 = vld [vmem:[%s418 + $0x78] sm:$0xff]
        %v607 = vld [vmem:[%s418 + $0x80] sm:$0xff]
        %v608 = vld [vmem:[%s418 + $0x88] sm:$0xff]
        %v609 = vld [vmem:[%s418 + $0x90] sm:$0xff]
        %v610 = vld [vmem:[%s418 + $0x98] sm:$0xff]
        %v611 = vld [vmem:[%s418 + $0xa0] sm:$0xff]
        %v612 = vld [vmem:[%s418 + $0xa8] sm:$0xff]
        %v613 = vld [vmem:[%s418 + $0xb0] sm:$0xff]
        %v614 = vld [vmem:[%s418 + $0xb8] sm:$0xff]
        %v615 = vld [vmem:[%s418 + $0xc0] sm:$0xff]
        %v616 = vld [vmem:[%s418 + $0xc8] sm:$0xff]
        %v617 = vld [vmem:[%s418 + $0xd0] sm:$0xff]
        %v618 = vld [vmem:[%s418 + $0xd8] sm:$0xff]
        %v619 = vld [vmem:[%s418 + $0xe0] sm:$0xff]
        %v620 = vld [vmem:[%s418 + $0xe8] sm:$0xff]
        %v621 = vld [vmem:[%s418 + $0xf0] sm:$0xff]
        %v622 = vld [vmem:[%s418 + $0xf8] sm:$0xff]
        %623 = vmatprep.subr.mxu0 0.0
        %624 = vmatpush1.msra.mxu0 %v591
        %625 = vmatprep.subr.mxu0 0.0
        %626 = vmatpush1.msra.mxu0 %v592
        %627 = vmatprep.subr.mxu0 0.0
        %628 = vmatpush1.msra.mxu0 %v593
        %629 = vmatprep.subr.mxu0 0.0
        %630 = vmatpush1.msra.mxu0 %v594
        %631 = vmatprep.subr.mxu0 0.0
        %632 = vmatpush1.msra.mxu0 %v595
        %633 = vmatprep.subr.mxu0 0.0
        %634 = vmatpush1.msra.mxu0 %v596
        %635 = vmatprep.subr.mxu0 0.0
        %636 = vmatpush1.msra.mxu0 %v597
        %637 = vmatprep.subr.mxu0 0.0
        %638 = vmatpush1.msra.mxu0 %v598
        %639 = vmatprep.subr.mxu0 0.0
        %640 = vmatpush1.msra.mxu0 %v599
        %641 = vmatprep.subr.mxu0 0.0
        %642 = vmatpush1.msra.mxu0 %v600
        %643 = vmatprep.subr.mxu0 0.0
        %644 = vmatpush1.msra.mxu0 %v601
        %645 = vmatprep.subr.mxu0 0.0
        %646 = vmatpush1.msra.mxu0 %v602
        %647 = vmatprep.subr.mxu0 0.0
        %648 = vmatpush1.msra.mxu0 %v603
        %649 = vmatprep.subr.mxu0 0.0
        %650 = vmatpush1.msra.mxu0 %v604
        %651 = vmatprep.subr.mxu0 0.0
        %652 = vmatpush1.msra.mxu0 %v605
        %653 = vmatprep.subr.mxu0 0.0
        %654 = vmatpush1.msra.mxu0 %v606
        %655 = vmatprep.subr.mxu0 0.0
        %656 = vmatpush1.msra.mxu0 %v607
        %657 = vmatprep.subr.mxu0 0.0
        %658 = vmatpush1.msra.mxu0 %v608
        %659 = vmatprep.subr.mxu0 0.0
        %660 = vmatpush1.msra.mxu0 %v609
        %661 = vmatprep.subr.mxu0 0.0
        %662 = vmatpush1.msra.mxu0 %v610
        %663 = vmatprep.subr.mxu0 0.0
        %664 = vmatpush1.msra.mxu0 %v611
        %665 = vmatprep.subr.mxu0 0.0
        %666 = vmatpush1.msra.mxu0 %v612
        %667 = vmatprep.subr.mxu0 0.0
        %668 = vmatpush1.msra.mxu0 %v613
        %669 = vmatprep.subr.mxu0 0.0
        %670 = vmatpush1.msra.mxu0 %v614
        %671 = vmatprep.subr.mxu0 0.0
        %672 = vmatpush1.msra.mxu0 %v615
        %673 = vmatprep.subr.mxu0 0.0
        %674 = vmatpush1.msra.mxu0 %v616
        %675 = vmatprep.subr.mxu0 0.0
        %676 = vmatpush1.msra.mxu0 %v617
        %677 = vmatprep.subr.mxu0 0.0
        %678 = vmatpush1.msra.mxu0 %v618
        %679 = vmatprep.subr.mxu0 0.0
        %680 = vmatpush1.msra.mxu0 %v619
        %681 = vmatprep.subr.mxu0 0.0
        %682 = vmatpush1.msra.mxu0 %v620
        %683 = vmatprep.subr.mxu0 0.0
        %684 = vmatpush1.msra.mxu0 %v621
        %685 = vmatprep.subr.mxu0 0.0
        %686 = vmatpush1.msra.mxu0 %v622
        %687 = vmatprep.mubr.f32.mxu0 %v496
        %688 = vmatmul.mubr.f32.gmra.mrb[0].mxu0 %v495
        %v689 = vpop.f32.mrb[0].mxu0
        %v690 = vadd.f32 0.0, %v689
        %v691 = vpop.f32.mrb[0].mxu0
        %692 = vmatprep.mubr.f32.mxu0 %v498
        %693 = vmatmul.mubr.f32.gmra.mrb[0].mxu0 %v497
        %v694 = vpop.f32.mrb[0].mxu0
        %v695 = vadd.f32 0.0, %v694
        %v696 = vpop.f32.mrb[0].mxu0
        %697 = vmatprep.mubr.f32.mxu0 %v500
        %698 = vmatmul.mubr.f32.gmra.mrb[0].mxu0 %v499
        %v699 = vpop.f32.mrb[0].mxu0
        %v700 = vadd.f32 0.0, %v699
        %v701 = vpop.f32.mrb[0].mxu0
        %702 = vmatprep.mubr.f32.mxu0 %v502
        %703 = vmatmul.mubr.f32.gmra.mrb[0].mxu0 %v501
        %v704 = vpop.f32.mrb[0].mxu0
        %v705 = vadd.f32 0.0, %v704
        %v706 = vpop.f32.mrb[0].mxu0
        %707 = vmatprep.mubr.f32.mxu0 %v504
        %708 = vmatmul.mubr.f32.gmra.mrb[0].mxu0 %v503
        %v709 = vpop.f32.mrb[0].mxu0
        %v710 = vadd.f32 0.0, %v709
        %v711 = vpop.f32.mrb[0].mxu0
        %712 = vmatprep.mubr.f32.mxu0 %v506
        %713 = vmatmul.mubr.f32.gmra.mrb[0].mxu0 %v505
        %v714 = vpop.f32.mrb[0].mxu0
        %v715 = vadd.f32 0.0, %v714
        %v716 = vpop.f32.mrb[0].mxu0
        %717 = vmatprep.mubr.f32.mxu0 %v508
        %718 = vmatmul.mubr.f32.gmra.mrb[0].mxu0 %v507
        %v719 = vpop.f32.mrb[0].mxu0
        %v720 = vadd.f32 0.0, %v719
        %v721 = vpop.f32.mrb[0].mxu0
        %722 = vmatprep.mubr.f32.mxu0 %v510
        %723 = vmatmul.mubr.f32.gmra.mrb[0].mxu0 %v509
        %v724 = vpop.f32.mrb[0].mxu0
        %v725 = vadd.f32 0.0, %v724
        %v726 = vpop.f32.mrb[0].mxu0
        %727 = vmatprep.mubr.f32.mxu0 %v512
        %728 = vmatmul.mubr.f32.gmra.mrb[0].mxu0 %v511
        %v729 = vpop.f32.mrb[0].mxu0
        %v730 = vadd.f32 0.0, %v729
        %v731 = vpop.f32.mrb[0].mxu0
        %732 = vmatprep.mubr.f32.mxu0 %v514
        %733 = vmatmul.mubr.f32.gmra.mrb[0].mxu0 %v513
        %v734 = vpop.f32.mrb[0].mxu0
        %v735 = vadd.f32 0.0, %v734
        %v736 = vpop.f32.mrb[0].mxu0
        %737 = vmatprep.mubr.f32.mxu0 %v516
        %738 = vmatmul.mubr.f32.gmra.mrb[0].mxu0 %v515
        %v739 = vpop.f32.mrb[0].mxu0
        %v740 = vadd.f32 0.0, %v739
        %v741 = vpop.f32.mrb[0].mxu0
        %742 = vmatprep.mubr.f32.mxu0 %v518
        %743 = vmatmul.mubr.f32.gmra.mrb[0].mxu0 %v517
        %v744 = vpop.f32.mrb[0].mxu0
        %v745 = vadd.f32 0.0, %v744
        %v746 = vpop.f32.mrb[0].mxu0
        %747 = vmatprep.mubr.f32.mxu0 %v520
        %748 = vmatmul.mubr.f32.gmra.mrb[0].mxu0 %v519
        %v749 = vpop.f32.mrb[0].mxu0
        %v750 = vadd.f32 0.0, %v749
        %v751 = vpop.f32.mrb[0].mxu0
        %752 = vmatprep.mubr.f32.mxu0 %v522
        %753 = vmatmul.mubr.f32.gmra.mrb[0].mxu0 %v521
        %v754 = vpop.f32.mrb[0].mxu0
        %v755 = vadd.f32 0.0, %v754
        %v756 = vpop.f32.mrb[0].mxu0
        %757 = vmatprep.mubr.f32.mxu0 %v524
        %758 = vmatmul.mubr.f32.gmra.mrb[0].mxu0 %v523
        %v759 = vpop.f32.mrb[0].mxu0
        %v760 = vadd.f32 0.0, %v759
        %v761 = vpop.f32.mrb[0].mxu0
        %762 = vmatprep.mubr.f32.mxu0 %v526
        %763 = vmatmul.mubr.f32.gmra.mrb[0].mxu0 %v525
        %v764 = vpop.f32.mrb[0].mxu0
        %v765 = vadd.f32 0.0, %v764
        %v766 = vpop.f32.mrb[0].mxu0
        %767 = vmatprep.mubr.f32.mxu0 %v528
        %768 = vmatmul.mubr.f32.gmra.mrb[0].mxu0 %v527
        %v769 = vpop.f32.mrb[0].mxu0
        %v770 = vadd.f32 0.0, %v769
        %v771 = vpop.f32.mrb[0].mxu0
        %772 = vmatprep.mubr.f32.mxu0 %v530
        %773 = vmatmul.mubr.f32.gmra.mrb[0].mxu0 %v529
        %v774 = vpop.f32.mrb[0].mxu0
        %v775 = vadd.f32 0.0, %v774
        %v776 = vpop.f32.mrb[0].mxu0
        %777 = vmatprep.mubr.f32.mxu0 %v532
        %778 = vmatmul.mubr.f32.gmra.mrb[0].mxu0 %v531
        %v779 = vpop.f32.mrb[0].mxu0
        %v780 = vadd.f32 0.0, %v779
        %v781 = vpop.f32.mrb[0].mxu0
        %782 = vmatprep.mubr.f32.mxu0 %v534
        %783 = vmatmul.mubr.f32.gmra.mrb[0].mxu0 %v533
        %v784 = vpop.f32.mrb[0].mxu0
        %v785 = vadd.f32 0.0, %v784
        %v786 = vpop.f32.mrb[0].mxu0
        %787 = vmatprep.mubr.f32.mxu0 %v536
        %788 = vmatmul.mubr.f32.gmra.mrb[0].mxu0 %v535
        %v789 = vpop.f32.mrb[0].mxu0
        %v790 = vadd.f32 0.0, %v789
        %v791 = vpop.f32.mrb[0].mxu0
        %792 = vmatprep.mubr.f32.mxu0 %v538
        %793 = vmatmul.mubr.f32.gmra.mrb[0].mxu0 %v537
        %v794 = vpop.f32.mrb[0].mxu0
        %v795 = vadd.f32 0.0, %v794
        %v796 = vpop.f32.mrb[0].mxu0
        %797 = vmatprep.mubr.f32.mxu0 %v540
        %798 = vmatmul.mubr.f32.gmra.mrb[0].mxu0 %v539
        %v799 = vpop.f32.mrb[0].mxu0
        %v800 = vadd.f32 0.0, %v799
        %v801 = vpop.f32.mrb[0].mxu0
        %802 = vmatprep.mubr.f32.mxu0 %v542
        %803 = vmatmul.mubr.f32.gmra.mrb[0].mxu0 %v541
        %v804 = vpop.f32.mrb[0].mxu0
        %v805 = vadd.f32 0.0, %v804
        %v806 = vpop.f32.mrb[0].mxu0
        %807 = vmatprep.mubr.f32.mxu0 %v544
        %808 = vmatmul.mubr.f32.gmra.mrb[0].mxu0 %v543
        %v809 = vpop.f32.mrb[0].mxu0
        %v810 = vadd.f32 0.0, %v809
        %v811 = vpop.f32.mrb[0].mxu0
        %812 = vmatprep.mubr.f32.mxu0 %v546
        %813 = vmatmul.mubr.f32.gmra.mrb[0].mxu0 %v545
        %v814 = vpop.f32.mrb[0].mxu0
        %v815 = vadd.f32 0.0, %v814
        %v816 = vpop.f32.mrb[0].mxu0
        %817 = vmatprep.mubr.f32.mxu0 %v548
        %818 = vmatmul.mubr.f32.gmra.mrb[0].mxu0 %v547
        %v819 = vpop.f32.mrb[0].mxu0
        %v820 = vadd.f32 0.0, %v819
        %v821 = vpop.f32.mrb[0].mxu0
        %822 = vmatprep.mubr.f32.mxu0 %v550
        %823 = vmatmul.mubr.f32.gmra.mrb[0].mxu0 %v549
        %v824 = vpop.f32.mrb[0].mxu0
        %v825 = vadd.f32 0.0, %v824
        %v826 = vpop.f32.mrb[0].mxu0
        %827 = vmatprep.mubr.f32.mxu0 %v552
        %828 = vmatmul.mubr.f32.gmra.mrb[0].mxu0 %v551
        %v829 = vpop.f32.mrb[0].mxu0
        %v830 = vadd.f32 0.0, %v829
        %v831 = vpop.f32.mrb[0].mxu0
        %832 = vmatprep.mubr.f32.mxu0 %v554
        %833 = vmatmul.mubr.f32.gmra.mrb[0].mxu0 %v553
        %v834 = vpop.f32.mrb[0].mxu0
        %v835 = vadd.f32 0.0, %v834
        %v836 = vpop.f32.mrb[0].mxu0
        %837 = vmatprep.mubr.f32.mxu0 %v556
        %838 = vmatmul.mubr.f32.gmra.mrb[0].mxu0 %v555
        %v839 = vpop.f32.mrb[0].mxu0
        %v840 = vadd.f32 0.0, %v839
        %v841 = vpop.f32.mrb[0].mxu0
        %842 = vmatprep.mubr.f32.mxu0 %v558
        %843 = vmatmul.mubr.f32.gmra.mrb[0].mxu0 %v557
        %v844 = vpop.f32.mrb[0].mxu0
        %v845 = vadd.f32 0.0, %v844
        %v846 = vpop.f32.mrb[0].mxu0
        %847 = vdwg.mxu0
        %v848 = vadd.f32 %v559, %v690
        %v849 = vadd.f32 %v560, %v695
        %v850 = vadd.f32 %v561, %v700
        %v851 = vadd.f32 %v562, %v705
        %v852 = vadd.f32 %v563, %v710
        %v853 = vadd.f32 %v564, %v715
        %v854 = vadd.f32 %v565, %v720
        %v855 = vadd.f32 %v566, %v725
        %v856 = vadd.f32 %v567, %v730
        %v857 = vadd.f32 %v568, %v735
        %v858 = vadd.f32 %v569, %v740
        %v859 = vadd.f32 %v570, %v745
        %v860 = vadd.f32 %v571, %v750
        %v861 = vadd.f32 %v572, %v755
        %v862 = vadd.f32 %v573, %v760
        %v863 = vadd.f32 %v574, %v765
        %v864 = vadd.f32 %v575, %v770
        %v865 = vadd.f32 %v576, %v775
        %v866 = vadd.f32 %v577, %v780
        %v867 = vadd.f32 %v578, %v785
        %v868 = vadd.f32 %v579, %v790
        %v869 = vadd.f32 %v580, %v795
        %v870 = vadd.f32 %v581, %v800
        %v871 = vadd.f32 %v582, %v805
        %v872 = vadd.f32 %v583, %v810
        %v873 = vadd.f32 %v584, %v815
        %v874 = vadd.f32 %v585, %v820
        %v875 = vadd.f32 %v586, %v825
        %v876 = vadd.f32 %v587, %v830
        %v877 = vadd.f32 %v588, %v835
        %v878 = vadd.f32 %v589, %v840
        %v879 = vadd.f32 %v590, %v845
        %vm880 = vcmask 64512
        %881 = vst.msk [vmem:[#allocation2] sm:$0xff] %vm880, %v848
        %882 = vst.msk [vmem:[#allocation2 + $0x8] sm:$0xff] %vm880, %v849
        %883 = vst.msk [vmem:[#allocation2 + $0x10] sm:$0xff] %vm880, %v850
        %884 = vst.msk [vmem:[#allocation2 + $0x18] sm:$0xff] %vm880, %v851
        %885 = vst.msk [vmem:[#allocation2 + $0x20] sm:$0xff] %vm880, %v852
        %886 = vst.msk [vmem:[#allocation2 + $0x28] sm:$0xff] %vm880, %v853
        %887 = vst.msk [vmem:[#allocation2 + $0x30] sm:$0xff] %vm880, %v854
        %888 = vst.msk [vmem:[#allocation2 + $0x38] sm:$0xff] %vm880, %v855
        %889 = vst.msk [vmem:[#allocation2 + $0x40] sm:$0xff] %vm880, %v856
        %890 = vst.msk [vmem:[#allocation2 + $0x48] sm:$0xff] %vm880, %v857
        %891 = vst.msk [vmem:[#allocation2 + $0x50] sm:$0xff] %vm880, %v858
        %892 = vst.msk [vmem:[#allocation2 + $0x58] sm:$0xff] %vm880, %v859
        %893 = vst.msk [vmem:[#allocation2 + $0x60] sm:$0xff] %vm880, %v860
        %894 = vst.msk [vmem:[#allocation2 + $0x68] sm:$0xff] %vm880, %v861
        %895 = vst.msk [vmem:[#allocation2 + $0x70] sm:$0xff] %vm880, %v862
        %896 = vst.msk [vmem:[#allocation2 + $0x78] sm:$0xff] %vm880, %v863
        %897 = vst.msk [vmem:[#allocation2 + $0x80] sm:$0xff] %vm880, %v864
        %898 = vst.msk [vmem:[#allocation2 + $0x88] sm:$0xff] %vm880, %v865
        %899 = vst.msk [vmem:[#allocation2 + $0x90] sm:$0xff] %vm880, %v866
        %900 = vst.msk [vmem:[#allocation2 + $0x98] sm:$0xff] %vm880, %v867
        %901 = vst.msk [vmem:[#allocation2 + $0xa0] sm:$0xff] %vm880, %v868
        %902 = vst.msk [vmem:[#allocation2 + $0xa8] sm:$0xff] %vm880, %v869
        %903 = vst.msk [vmem:[#allocation2 + $0xb0] sm:$0xff] %vm880, %v870
        %904 = vst.msk [vmem:[#allocation2 + $0xb8] sm:$0xff] %vm880, %v871
        %905 = vst.msk [vmem:[#allocation2 + $0xc0] sm:$0xff] %vm880, %v872
        %906 = vst.msk [vmem:[#allocation2 + $0xc8] sm:$0xff] %vm880, %v873
        %907 = vst.msk [vmem:[#allocation2 + $0xd0] sm:$0xff] %vm880, %v874
        %908 = vst.msk [vmem:[#allocation2 + $0xd8] sm:$0xff] %vm880, %v875
        %909 = vst.msk [vmem:[#allocation2 + $0xe0] sm:$0xff] %vm880, %v876
        %910 = vst.msk [vmem:[#allocation2 + $0xe8] sm:$0xff] %vm880, %v877
        %911 = vst.msk [vmem:[#allocation2 + $0xf0] sm:$0xff] %vm880, %v878
        %912 = vst.msk [vmem:[#allocation2 + $0xf8] sm:$0xff] %vm880, %v879
        %p913 = scmp.eq.s32.totalorder %s21, 1
        // Predicated region
        $region83: #{net_forward.2} parent=73 // pred_check
          %p914 = pneg %p913
        $region84: #{net_forward.2} parent=73 // pred_check_branch
          %916 = sbr.rel (%p914) target = $region86
        $region85: #{net_forward.2} parent=73 // pred_region
          %v917 = vld [vmem:[#allocation2] sm:$0xff]
          %v918 = vld [vmem:[#allocation2 + $0x8] sm:$0xff]
          %v919 = vld [vmem:[#allocation2 + $0x10] sm:$0xff]
          %v920 = vld [vmem:[#allocation2 + $0x18] sm:$0xff]
          %v921 = vld [vmem:[#allocation2 + $0x20] sm:$0xff]
          %v922 = vld [vmem:[#allocation2 + $0x28] sm:$0xff]
          %v923 = vld [vmem:[#allocation2 + $0x30] sm:$0xff]
          %v924 = vld [vmem:[#allocation2 + $0x38] sm:$0xff]
          %v925 = vld [vmem:[#allocation2 + $0x40] sm:$0xff]
          %v926 = vld [vmem:[#allocation2 + $0x48] sm:$0xff]
          %v927 = vld [vmem:[#allocation2 + $0x50] sm:$0xff]
          %v928 = vld [vmem:[#allocation2 + $0x58] sm:$0xff]
          %v929 = vld [vmem:[#allocation2 + $0x60] sm:$0xff]
          %v930 = vld [vmem:[#allocation2 + $0x68] sm:$0xff]
          %v931 = vld [vmem:[#allocation2 + $0x70] sm:$0xff]
          %v932 = vld [vmem:[#allocation2 + $0x78] sm:$0xff]
          %v933 = vld [vmem:[#allocation2 + $0x80] sm:$0xff]
          %v934 = vld [vmem:[#allocation2 + $0x88] sm:$0xff]
          %v935 = vld [vmem:[#allocation2 + $0x90] sm:$0xff]
          %v936 = vld [vmem:[#allocation2 + $0x98] sm:$0xff]
          %v937 = vld [vmem:[#allocation2 + $0xa0] sm:$0xff]
          %v938 = vld [vmem:[#allocation2 + $0xa8] sm:$0xff]
          %v939 = vld [vmem:[#allocation2 + $0xb0] sm:$0xff]
          %v940 = vld [vmem:[#allocation2 + $0xb8] sm:$0xff]
          %v941 = vld [vmem:[#allocation2 + $0xc0] sm:$0xff]
          %v942 = vld [vmem:[#allocation2 + $0xc8] sm:$0xff]
          %v943 = vld [vmem:[#allocation2 + $0xd0] sm:$0xff]
          %v944 = vld [vmem:[#allocation2 + $0xd8] sm:$0xff]
          %v945 = vld [vmem:[#allocation2 + $0xe0] sm:$0xff]
          %v946 = vld [vmem:[#allocation2 + $0xe8] sm:$0xff]
          %v947 = vld [vmem:[#allocation2 + $0xf0] sm:$0xff]
          %v948 = vld [vmem:[#allocation2 + $0xf8] sm:$0xff]
          %v949 = vld [vmem:[%s2] sm:$0xff]
          %v950 = vld [vmem:[%s3] sm:$0x1]
          %v952 = vlaneseq
          %v953 = vshrl.u32 %v952, 7
          %v954 = vsub.s32 0, %v953
          %v955 = vrot.slane %v950, %v954
          %v958 = vsel %vm880, %v917, 0
          %v961 = vsel %vm880, %v918, 0
          %v964 = vsel %vm880, %v919, 0
          %v967 = vsel %vm880, %v920, 0
          %v970 = vsel %vm880, %v921, 0
          %v973 = vsel %vm880, %v922, 0
          %v976 = vsel %vm880, %v923, 0
          %v979 = vsel %vm880, %v924, 0
          %v982 = vsel %vm880, %v925, 0
          %v985 = vsel %vm880, %v926, 0
          %v988 = vsel %vm880, %v927, 0
          %v991 = vsel %vm880, %v928, 0
          %v994 = vsel %vm880, %v929, 0
          %v997 = vsel %vm880, %v930, 0
          %v1000 = vsel %vm880, %v931, 0
          %v1003 = vsel %vm880, %v932, 0
          %v1006 = vsel %vm880, %v933, 0
          %v1009 = vsel %vm880, %v934, 0
          %v1012 = vsel %vm880, %v935, 0
          %v1015 = vsel %vm880, %v936, 0
          %v1018 = vsel %vm880, %v937, 0
          %v1021 = vsel %vm880, %v938, 0
          %v1024 = vsel %vm880, %v939, 0
          %v1027 = vsel %vm880, %v940, 0
          %v1030 = vsel %vm880, %v941, 0
          %v1033 = vsel %vm880, %v942, 0
          %v1036 = vsel %vm880, %v943, 0
          %v1039 = vsel %vm880, %v944, 0
          %v1042 = vsel %vm880, %v945, 0
          %v1045 = vsel %vm880, %v946, 0
          %v1048 = vsel %vm880, %v947, 0
          %v1051 = vsel %vm880, %v948, 0
          %1053 = vmatprep.subr.mxu0 0.0
          %1054 = vmatpush1.msra.mxu0 %v949
          %1055 = vmatprep.subr.mxu0 0.0
          %1056 = vmatpush1.msra.mxu0 0.0
          %1057 = vmatprep.subr.mxu0 0.0
          %1058 = vmatpush1.msra.mxu0 0.0
          %1059 = vmatprep.subr.mxu0 0.0
          %1060 = vmatpush1.msra.mxu0 0.0
          %1061 = vmatprep.subr.mxu0 0.0
          %1062 = vmatpush1.msra.mxu0 0.0
          %1063 = vmatprep.subr.mxu0 0.0
          %1064 = vmatpush1.msra.mxu0 0.0
          %1065 = vmatprep.subr.mxu0 0.0
          %1066 = vmatpush1.msra.mxu0 0.0
          %1067 = vmatprep.subr.mxu0 0.0
          %1068 = vmatpush1.msra.mxu0 0.0
          %1069 = vmatprep.subr.mxu0 0.0
          %1070 = vmatpush1.msra.mxu0 0.0
          %1071 = vmatprep.subr.mxu0 0.0
          %1072 = vmatpush1.msra.mxu0 0.0
          %1073 = vmatprep.subr.mxu0 0.0
          %1074 = vmatpush1.msra.mxu0 0.0
          %1075 = vmatprep.subr.mxu0 0.0
          %1076 = vmatpush1.msra.mxu0 0.0
          %1077 = vmatprep.subr.mxu0 0.0
          %1078 = vmatpush1.msra.mxu0 0.0
          %1079 = vmatprep.subr.mxu0 0.0
          %1080 = vmatpush1.msra.mxu0 0.0
          %1081 = vmatprep.subr.mxu0 0.0
          %1082 = vmatpush1.msra.mxu0 0.0
          %1083 = vmatprep.subr.mxu0 0.0
          %1084 = vmatpush1.msra.mxu0 0.0
          %1085 = vmatprep.subr.mxu0 0.0
          %1086 = vmatpush1.msra.mxu0 0.0
          %1087 = vmatprep.subr.mxu0 0.0
          %1088 = vmatpush1.msra.mxu0 0.0
          %1089 = vmatprep.subr.mxu0 0.0
          %1090 = vmatpush1.msra.mxu0 0.0
          %1091 = vmatprep.subr.mxu0 0.0
          %1092 = vmatpush1.msra.mxu0 0.0
          %1093 = vmatprep.subr.mxu0 0.0
          %1094 = vmatpush1.msra.mxu0 0.0
          %1095 = vmatprep.subr.mxu0 0.0
          %1096 = vmatpush1.msra.mxu0 0.0
          %1097 = vmatprep.subr.mxu0 0.0
          %1098 = vmatpush1.msra.mxu0 0.0
          %1099 = vmatprep.subr.mxu0 0.0
          %1100 = vmatpush1.msra.mxu0 0.0
          %1101 = vmatprep.subr.mxu0 0.0
          %1102 = vmatpush1.msra.mxu0 0.0
          %1103 = vmatprep.subr.mxu0 0.0
          %1104 = vmatpush1.msra.mxu0 0.0
          %1105 = vmatprep.subr.mxu0 0.0
          %1106 = vmatpush1.msra.mxu0 0.0
          %1107 = vmatprep.subr.mxu0 0.0
          %1108 = vmatpush1.msra.mxu0 0.0
          %1109 = vmatprep.subr.mxu0 0.0
          %1110 = vmatpush1.msra.mxu0 0.0
          %1111 = vmatprep.subr.mxu0 0.0
          %1112 = vmatpush1.msra.mxu0 0.0
          %1113 = vmatprep.subr.mxu0 0.0
          %1114 = vmatpush1.msra.mxu0 0.0
          %1115 = vmatprep.subr.mxu0 0.0
          %1116 = vmatpush1.msra.mxu0 0.0
          %1117 = vmatprep.mubr.f32.mxu0 0.0
          %1118 = vmatmul.mubr.f32.gmra.mrb[0].mxu0 %v958
          %v1119 = vpop.f32.mrb[0].mxu0
          %v1120 = vadd.f32 %v955, %v1119
          %v1121 = vpop.f32.mrb[0].mxu0
          %1122 = vmatprep.mubr.f32.mxu0 0.0
          %1123 = vmatmul.mubr.f32.gmra.mrb[0].mxu0 %v961
          %v1124 = vpop.f32.mrb[0].mxu0
          %v1125 = vadd.f32 %v955, %v1124
          %v1126 = vpop.f32.mrb[0].mxu0
          %1127 = vmatprep.mubr.f32.mxu0 0.0
          %1128 = vmatmul.mubr.f32.gmra.mrb[0].mxu0 %v964
          %v1129 = vpop.f32.mrb[0].mxu0
          %v1130 = vadd.f32 %v955, %v1129
          %v1131 = vpop.f32.mrb[0].mxu0
          %1132 = vmatprep.mubr.f32.mxu0 0.0
          %1133 = vmatmul.mubr.f32.gmra.mrb[0].mxu0 %v967
          %v1134 = vpop.f32.mrb[0].mxu0
          %v1135 = vadd.f32 %v955, %v1134
          %v1136 = vpop.f32.mrb[0].mxu0
          %1137 = vmatprep.mubr.f32.mxu0 0.0
          %1138 = vmatmul.mubr.f32.gmra.mrb[0].mxu0 %v970
          %v1139 = vpop.f32.mrb[0].mxu0
          %v1140 = vadd.f32 %v955, %v1139
          %v1141 = vpop.f32.mrb[0].mxu0
          %1142 = vmatprep.mubr.f32.mxu0 0.0
          %1143 = vmatmul.mubr.f32.gmra.mrb[0].mxu0 %v973
          %v1144 = vpop.f32.mrb[0].mxu0
          %v1145 = vadd.f32 %v955, %v1144
          %v1146 = vpop.f32.mrb[0].mxu0
          %1147 = vmatprep.mubr.f32.mxu0 0.0
          %1148 = vmatmul.mubr.f32.gmra.mrb[0].mxu0 %v976
          %v1149 = vpop.f32.mrb[0].mxu0
          %v1150 = vadd.f32 %v955, %v1149
          %v1151 = vpop.f32.mrb[0].mxu0
          %1152 = vmatprep.mubr.f32.mxu0 0.0
          %1153 = vmatmul.mubr.f32.gmra.mrb[0].mxu0 %v979
          %v1154 = vpop.f32.mrb[0].mxu0
          %v1155 = vadd.f32 %v955, %v1154
          %v1156 = vpop.f32.mrb[0].mxu0
          %1157 = vmatprep.mubr.f32.mxu0 0.0
          %1158 = vmatmul.mubr.f32.gmra.mrb[0].mxu0 %v982
          %v1159 = vpop.f32.mrb[0].mxu0
          %v1160 = vadd.f32 %v955, %v1159
          %v1161 = vpop.f32.mrb[0].mxu0
          %1162 = vmatprep.mubr.f32.mxu0 0.0
          %1163 = vmatmul.mubr.f32.gmra.mrb[0].mxu0 %v985
          %v1164 = vpop.f32.mrb[0].mxu0
          %v1165 = vadd.f32 %v955, %v1164
          %v1166 = vpop.f32.mrb[0].mxu0
          %1167 = vmatprep.mubr.f32.mxu0 0.0
          %1168 = vmatmul.mubr.f32.gmra.mrb[0].mxu0 %v988
          %v1169 = vpop.f32.mrb[0].mxu0
          %v1170 = vadd.f32 %v955, %v1169
          %v1171 = vpop.f32.mrb[0].mxu0
          %1172 = vmatprep.mubr.f32.mxu0 0.0
          %1173 = vmatmul.mubr.f32.gmra.mrb[0].mxu0 %v991
          %v1174 = vpop.f32.mrb[0].mxu0
          %v1175 = vadd.f32 %v955, %v1174
          %v1176 = vpop.f32.mrb[0].mxu0
          %1177 = vmatprep.mubr.f32.mxu0 0.0
          %1178 = vmatmul.mubr.f32.gmra.mrb[0].mxu0 %v994
          %v1179 = vpop.f32.mrb[0].mxu0
          %v1180 = vadd.f32 %v955, %v1179
          %v1181 = vpop.f32.mrb[0].mxu0
          %1182 = vmatprep.mubr.f32.mxu0 0.0
          %1183 = vmatmul.mubr.f32.gmra.mrb[0].mxu0 %v997
          %v1184 = vpop.f32.mrb[0].mxu0
          %v1185 = vadd.f32 %v955, %v1184
          %v1186 = vpop.f32.mrb[0].mxu0
          %1187 = vmatprep.mubr.f32.mxu0 0.0
          %1188 = vmatmul.mubr.f32.gmra.mrb[0].mxu0 %v1000
          %v1189 = vpop.f32.mrb[0].mxu0
          %v1190 = vadd.f32 %v955, %v1189
          %v1191 = vpop.f32.mrb[0].mxu0
          %1192 = vmatprep.mubr.f32.mxu0 0.0
          %1193 = vmatmul.mubr.f32.gmra.mrb[0].mxu0 %v1003
          %v1194 = vpop.f32.mrb[0].mxu0
          %v1195 = vadd.f32 %v955, %v1194
          %v1196 = vpop.f32.mrb[0].mxu0
          %1197 = vmatprep.mubr.f32.mxu0 0.0
          %1198 = vmatmul.mubr.f32.gmra.mrb[0].mxu0 %v1006
          %v1199 = vpop.f32.mrb[0].mxu0
          %v1200 = vadd.f32 %v955, %v1199
          %v1201 = vpop.f32.mrb[0].mxu0
          %1202 = vmatprep.mubr.f32.mxu0 0.0
          %1203 = vmatmul.mubr.f32.gmra.mrb[0].mxu0 %v1009
          %v1204 = vpop.f32.mrb[0].mxu0
          %v1205 = vadd.f32 %v955, %v1204
          %v1206 = vpop.f32.mrb[0].mxu0
          %1207 = vmatprep.mubr.f32.mxu0 0.0
          %1208 = vmatmul.mubr.f32.gmra.mrb[0].mxu0 %v1012
          %v1209 = vpop.f32.mrb[0].mxu0
          %v1210 = vadd.f32 %v955, %v1209
          %v1211 = vpop.f32.mrb[0].mxu0
          %1212 = vmatprep.mubr.f32.mxu0 0.0
          %1213 = vmatmul.mubr.f32.gmra.mrb[0].mxu0 %v1015
          %v1214 = vpop.f32.mrb[0].mxu0
          %v1215 = vadd.f32 %v955, %v1214
          %v1216 = vpop.f32.mrb[0].mxu0
          %1217 = vmatprep.mubr.f32.mxu0 0.0
          %1218 = vmatmul.mubr.f32.gmra.mrb[0].mxu0 %v1018
          %v1219 = vpop.f32.mrb[0].mxu0
          %v1220 = vadd.f32 %v955, %v1219
          %v1221 = vpop.f32.mrb[0].mxu0
          %1222 = vmatprep.mubr.f32.mxu0 0.0
          %1223 = vmatmul.mubr.f32.gmra.mrb[0].mxu0 %v1021
          %v1224 = vpop.f32.mrb[0].mxu0
          %v1225 = vadd.f32 %v955, %v1224
          %v1226 = vpop.f32.mrb[0].mxu0
          %1227 = vmatprep.mubr.f32.mxu0 0.0
          %1228 = vmatmul.mubr.f32.gmra.mrb[0].mxu0 %v1024
          %v1229 = vpop.f32.mrb[0].mxu0
          %v1230 = vadd.f32 %v955, %v1229
          %v1231 = vpop.f32.mrb[0].mxu0
          %1232 = vmatprep.mubr.f32.mxu0 0.0
          %1233 = vmatmul.mubr.f32.gmra.mrb[0].mxu0 %v1027
          %v1234 = vpop.f32.mrb[0].mxu0
          %v1235 = vadd.f32 %v955, %v1234
          %v1236 = vpop.f32.mrb[0].mxu0
          %1237 = vmatprep.mubr.f32.mxu0 0.0
          %1238 = vmatmul.mubr.f32.gmra.mrb[0].mxu0 %v1030
          %v1239 = vpop.f32.mrb[0].mxu0
          %v1240 = vadd.f32 %v955, %v1239
          %v1241 = vpop.f32.mrb[0].mxu0
          %1242 = vmatprep.mubr.f32.mxu0 0.0
          %1243 = vmatmul.mubr.f32.gmra.mrb[0].mxu0 %v1033
          %v1244 = vpop.f32.mrb[0].mxu0
          %v1245 = vadd.f32 %v955, %v1244
          %v1246 = vpop.f32.mrb[0].mxu0
          %1247 = vmatprep.mubr.f32.mxu0 0.0
          %1248 = vmatmul.mubr.f32.gmra.mrb[0].mxu0 %v1036
          %v1249 = vpop.f32.mrb[0].mxu0
          %v1250 = vadd.f32 %v955, %v1249
          %v1251 = vpop.f32.mrb[0].mxu0
          %1252 = vmatprep.mubr.f32.mxu0 0.0
          %1253 = vmatmul.mubr.f32.gmra.mrb[0].mxu0 %v1039
          %v1254 = vpop.f32.mrb[0].mxu0
          %v1255 = vadd.f32 %v955, %v1254
          %v1256 = vpop.f32.mrb[0].mxu0
          %1257 = vmatprep.mubr.f32.mxu0 0.0
          %1258 = vmatmul.mubr.f32.gmra.mrb[0].mxu0 %v1042
          %v1259 = vpop.f32.mrb[0].mxu0
          %v1260 = vadd.f32 %v955, %v1259
          %v1261 = vpop.f32.mrb[0].mxu0
          %1262 = vmatprep.mubr.f32.mxu0 0.0
          %1263 = vmatmul.mubr.f32.gmra.mrb[0].mxu0 %v1045
          %v1264 = vpop.f32.mrb[0].mxu0
          %v1265 = vadd.f32 %v955, %v1264
          %v1266 = vpop.f32.mrb[0].mxu0
          %1267 = vmatprep.mubr.f32.mxu0 0.0
          %1268 = vmatmul.mubr.f32.gmra.mrb[0].mxu0 %v1048
          %v1269 = vpop.f32.mrb[0].mxu0
          %v1270 = vadd.f32 %v955, %v1269
          %v1271 = vpop.f32.mrb[0].mxu0
          %1272 = vmatprep.mubr.f32.mxu0 0.0
          %1273 = vmatmul.mubr.f32.gmra.mrb[0].mxu0 %v1051
          %v1274 = vpop.f32.mrb[0].mxu0
          %v1275 = vadd.f32 %v955, %v1274
          %v1276 = vpop.f32.mrb[0].mxu0
          %1277 = vdwg.mxu0
          %v1278 = vmax.f32 %v1120, 0.0
          %v1279 = vmax.f32 %v1125, 0.0
          %v1280 = vmax.f32 %v1130, 0.0
          %v1281 = vmax.f32 %v1135, 0.0
          %v1282 = vmax.f32 %v1140, 0.0
          %v1283 = vmax.f32 %v1145, 0.0
          %v1284 = vmax.f32 %v1150, 0.0
          %v1285 = vmax.f32 %v1155, 0.0
          %v1286 = vmax.f32 %v1160, 0.0
          %v1287 = vmax.f32 %v1165, 0.0
          %v1288 = vmax.f32 %v1170, 0.0
          %v1289 = vmax.f32 %v1175, 0.0
          %v1290 = vmax.f32 %v1180, 0.0
          %v1291 = vmax.f32 %v1185, 0.0
          %v1292 = vmax.f32 %v1190, 0.0
          %v1293 = vmax.f32 %v1195, 0.0
          %v1294 = vmax.f32 %v1200, 0.0
          %v1295 = vmax.f32 %v1205, 0.0
          %v1296 = vmax.f32 %v1210, 0.0
          %v1297 = vmax.f32 %v1215, 0.0
          %v1298 = vmax.f32 %v1220, 0.0
          %v1299 = vmax.f32 %v1225, 0.0
          %v1300 = vmax.f32 %v1230, 0.0
          %v1301 = vmax.f32 %v1235, 0.0
          %v1302 = vmax.f32 %v1240, 0.0
          %v1303 = vmax.f32 %v1245, 0.0
          %v1304 = vmax.f32 %v1250, 0.0
          %v1305 = vmax.f32 %v1255, 0.0
          %v1306 = vmax.f32 %v1260, 0.0
          %v1307 = vmax.f32 %v1265, 0.0
          %v1308 = vmax.f32 %v1270, 0.0
          %v1309 = vmax.f32 %v1275, 0.0
          %v1310 = vld [vmem:[%s4] sm:$0xff]
          %v1311 = vld [vmem:[%s4 + $0x8] sm:$0xff]
          %v1312 = vld [vmem:[%s4 + $0x10] sm:$0xff]
          %v1313 = vld [vmem:[%s4 + $0x18] sm:$0xff]
          %vm1314 = vcmask 261120
          %v1316 = vsel %vm1314, %v1278, 0
          %v1319 = vsel %vm1314, %v1279, 0
          %v1322 = vsel %vm1314, %v1280, 0
          %v1325 = vsel %vm1314, %v1281, 0
          %v1328 = vsel %vm1314, %v1282, 0
          %v1331 = vsel %vm1314, %v1283, 0
          %v1334 = vsel %vm1314, %v1284, 0
          %v1337 = vsel %vm1314, %v1285, 0
          %v1340 = vsel %vm1314, %v1286, 0
          %v1343 = vsel %vm1314, %v1287, 0
          %v1346 = vsel %vm1314, %v1288, 0
          %v1349 = vsel %vm1314, %v1289, 0
          %v1352 = vsel %vm1314, %v1290, 0
          %v1355 = vsel %vm1314, %v1291, 0
          %v1358 = vsel %vm1314, %v1292, 0
          %v1361 = vsel %vm1314, %v1293, 0
          %v1364 = vsel %vm1314, %v1294, 0
          %v1367 = vsel %vm1314, %v1295, 0
          %v1370 = vsel %vm1314, %v1296, 0
          %v1373 = vsel %vm1314, %v1297, 0
          %v1376 = vsel %vm1314, %v1298, 0
          %v1379 = vsel %vm1314, %v1299, 0
          %v1382 = vsel %vm1314, %v1300, 0
          %v1385 = vsel %vm1314, %v1301, 0
          %v1388 = vsel %vm1314, %v1302, 0
          %v1391 = vsel %vm1314, %v1303, 0
          %v1394 = vsel %vm1314, %v1304, 0
          %v1397 = vsel %vm1314, %v1305, 0
          %v1400 = vsel %vm1314, %v1306, 0
          %v1403 = vsel %vm1314, %v1307, 0
          %v1406 = vsel %vm1314, %v1308, 0
          %v1409 = vsel %vm1314, %v1309, 0
          %1411 = vmatprep.subr.mxu0 0.0
          %1412 = vmatpush1.msra.mxu0 %v1310
          %1413 = vmatprep.subr.mxu0 0.0
          %1414 = vmatpush1.msra.mxu0 %v1311
          %1415 = vmatprep.subr.mxu0 0.0
          %1416 = vmatpush1.msra.mxu0 %v1312
          %1417 = vmatprep.subr.mxu0 0.0
          %1418 = vmatpush1.msra.mxu0 %v1313
          %1419 = vmatprep.subr.mxu0 0.0
          %1420 = vmatpush1.msra.mxu0 0.0
          %1421 = vmatprep.subr.mxu0 0.0
          %1422 = vmatpush1.msra.mxu0 0.0
          %1423 = vmatprep.subr.mxu0 0.0
          %1424 = vmatpush1.msra.mxu0 0.0
          %1425 = vmatprep.subr.mxu0 0.0
          %1426 = vmatpush1.msra.mxu0 0.0
          %1427 = vmatprep.subr.mxu0 0.0
          %1428 = vmatpush1.msra.mxu0 0.0
          %1429 = vmatprep.subr.mxu0 0.0
          %1430 = vmatpush1.msra.mxu0 0.0
          %1431 = vmatprep.subr.mxu0 0.0
          %1432 = vmatpush1.msra.mxu0 0.0
          %1433 = vmatprep.subr.mxu0 0.0
          %1434 = vmatpush1.msra.mxu0 0.0
          %1435 = vmatprep.subr.mxu0 0.0
          %1436 = vmatpush1.msra.mxu0 0.0
          %1437 = vmatprep.subr.mxu0 0.0
          %1438 = vmatpush1.msra.mxu0 0.0
          %1439 = vmatprep.subr.mxu0 0.0
          %1440 = vmatpush1.msra.mxu0 0.0
          %1441 = vmatprep.subr.mxu0 0.0
          %1442 = vmatpush1.msra.mxu0 0.0
          %1443 = vmatprep.subr.mxu0 0.0
          %1444 = vmatpush1.msra.mxu0 0.0
          %1445 = vmatprep.subr.mxu0 0.0
          %1446 = vmatpush1.msra.mxu0 0.0
          %1447 = vmatprep.subr.mxu0 0.0
          %1448 = vmatpush1.msra.mxu0 0.0
          %1449 = vmatprep.subr.mxu0 0.0
          %1450 = vmatpush1.msra.mxu0 0.0
          %1451 = vmatprep.subr.mxu0 0.0
          %1452 = vmatpush1.msra.mxu0 0.0
          %1453 = vmatprep.subr.mxu0 0.0
          %1454 = vmatpush1.msra.mxu0 0.0
          %1455 = vmatprep.subr.mxu0 0.0
          %1456 = vmatpush1.msra.mxu0 0.0
          %1457 = vmatprep.subr.mxu0 0.0
          %1458 = vmatpush1.msra.mxu0 0.0
          %1459 = vmatprep.subr.mxu0 0.0
          %1460 = vmatpush1.msra.mxu0 0.0
          %1461 = vmatprep.subr.mxu0 0.0
          %1462 = vmatpush1.msra.mxu0 0.0
          %1463 = vmatprep.subr.mxu0 0.0
          %1464 = vmatpush1.msra.mxu0 0.0
          %1465 = vmatprep.subr.mxu0 0.0
          %1466 = vmatpush1.msra.mxu0 0.0
          %1467 = vmatprep.subr.mxu0 0.0
          %1468 = vmatpush1.msra.mxu0 0.0
          %1469 = vmatprep.subr.mxu0 0.0
          %1470 = vmatpush1.msra.mxu0 0.0
          %1471 = vmatprep.subr.mxu0 0.0
          %1472 = vmatpush1.msra.mxu0 0.0
          %1473 = vmatprep.subr.mxu0 0.0
          %1474 = vmatpush1.msra.mxu0 0.0
          %1475 = vmatprep.mubr.f32.mxu0 0.0
          %1476 = vmatmul.mubr.f32.gmra.mrb[0].mxu0 %v1316
          %v1477 = vpop.f32.mrb[0].mxu0
          %v1478 = vadd.f32 0.0, %v1477
          %v1479 = vpop.f32.mrb[0].mxu0
          %1480 = vmatprep.mubr.f32.mxu0 0.0
          %1481 = vmatmul.mubr.f32.gmra.mrb[0].mxu0 %v1319
          %v1482 = vpop.f32.mrb[0].mxu0
          %v1483 = vadd.f32 0.0, %v1482
          %v1484 = vpop.f32.mrb[0].mxu0
          %1485 = vmatprep.mubr.f32.mxu0 0.0
          %1486 = vmatmul.mubr.f32.gmra.mrb[0].mxu0 %v1322
          %v1487 = vpop.f32.mrb[0].mxu0
          %v1488 = vadd.f32 0.0, %v1487
          %v1489 = vpop.f32.mrb[0].mxu0
          %1490 = vmatprep.mubr.f32.mxu0 0.0
          %1491 = vmatmul.mubr.f32.gmra.mrb[0].mxu0 %v1325
          %v1492 = vpop.f32.mrb[0].mxu0
          %v1493 = vadd.f32 0.0, %v1492
          %v1494 = vpop.f32.mrb[0].mxu0
          %1495 = vmatprep.mubr.f32.mxu0 0.0
          %1496 = vmatmul.mubr.f32.gmra.mrb[0].mxu0 %v1328
          %v1497 = vpop.f32.mrb[0].mxu0
          %v1498 = vadd.f32 0.0, %v1497
          %v1499 = vpop.f32.mrb[0].mxu0
          %1500 = vmatprep.mubr.f32.mxu0 0.0
          %1501 = vmatmul.mubr.f32.gmra.mrb[0].mxu0 %v1331
          %v1502 = vpop.f32.mrb[0].mxu0
          %v1503 = vadd.f32 0.0, %v1502
          %v1504 = vpop.f32.mrb[0].mxu0
          %1505 = vmatprep.mubr.f32.mxu0 0.0
          %1506 = vmatmul.mubr.f32.gmra.mrb[0].mxu0 %v1334
          %v1507 = vpop.f32.mrb[0].mxu0
          %v1508 = vadd.f32 0.0, %v1507
          %v1509 = vpop.f32.mrb[0].mxu0
          %1510 = vmatprep.mubr.f32.mxu0 0.0
          %1511 = vmatmul.mubr.f32.gmra.mrb[0].mxu0 %v1337
          %v1512 = vpop.f32.mrb[0].mxu0
          %v1513 = vadd.f32 0.0, %v1512
          %v1514 = vpop.f32.mrb[0].mxu0
          %1515 = vmatprep.mubr.f32.mxu0 0.0
          %1516 = vmatmul.mubr.f32.gmra.mrb[0].mxu0 %v1340
          %v1517 = vpop.f32.mrb[0].mxu0
          %v1518 = vadd.f32 0.0, %v1517
          %v1519 = vpop.f32.mrb[0].mxu0
          %1520 = vmatprep.mubr.f32.mxu0 0.0
          %1521 = vmatmul.mubr.f32.gmra.mrb[0].mxu0 %v1343
          %v1522 = vpop.f32.mrb[0].mxu0
          %v1523 = vadd.f32 0.0, %v1522
          %v1524 = vpop.f32.mrb[0].mxu0
          %1525 = vmatprep.mubr.f32.mxu0 0.0
          %1526 = vmatmul.mubr.f32.gmra.mrb[0].mxu0 %v1346
          %v1527 = vpop.f32.mrb[0].mxu0
          %v1528 = vadd.f32 0.0, %v1527
          %v1529 = vpop.f32.mrb[0].mxu0
          %1530 = vmatprep.mubr.f32.mxu0 0.0
          %1531 = vmatmul.mubr.f32.gmra.mrb[0].mxu0 %v1349
          %v1532 = vpop.f32.mrb[0].mxu0
          %v1533 = vadd.f32 0.0, %v1532
          %v1534 = vpop.f32.mrb[0].mxu0
          %1535 = vmatprep.mubr.f32.mxu0 0.0
          %1536 = vmatmul.mubr.f32.gmra.mrb[0].mxu0 %v1352
          %v1537 = vpop.f32.mrb[0].mxu0
          %v1538 = vadd.f32 0.0, %v1537
          %v1539 = vpop.f32.mrb[0].mxu0
          %1540 = vmatprep.mubr.f32.mxu0 0.0
          %1541 = vmatmul.mubr.f32.gmra.mrb[0].mxu0 %v1355
          %v1542 = vpop.f32.mrb[0].mxu0
          %v1543 = vadd.f32 0.0, %v1542
          %v1544 = vpop.f32.mrb[0].mxu0
          %1545 = vmatprep.mubr.f32.mxu0 0.0
          %1546 = vmatmul.mubr.f32.gmra.mrb[0].mxu0 %v1358
          %v1547 = vpop.f32.mrb[0].mxu0
          %v1548 = vadd.f32 0.0, %v1547
          %v1549 = vpop.f32.mrb[0].mxu0
          %1550 = vmatprep.mubr.f32.mxu0 0.0
          %1551 = vmatmul.mubr.f32.gmra.mrb[0].mxu0 %v1361
          %v1552 = vpop.f32.mrb[0].mxu0
          %v1553 = vadd.f32 0.0, %v1552
          %v1554 = vpop.f32.mrb[0].mxu0
          %1555 = vmatprep.mubr.f32.mxu0 0.0
          %1556 = vmatmul.mubr.f32.gmra.mrb[0].mxu0 %v1364
          %v1557 = vpop.f32.mrb[0].mxu0
          %v1558 = vadd.f32 0.0, %v1557
          %v1559 = vpop.f32.mrb[0].mxu0
          %1560 = vmatprep.mubr.f32.mxu0 0.0
          %1561 = vmatmul.mubr.f32.gmra.mrb[0].mxu0 %v1367
          %v1562 = vpop.f32.mrb[0].mxu0
          %v1563 = vadd.f32 0.0, %v1562
          %v1564 = vpop.f32.mrb[0].mxu0
          %1565 = vmatprep.mubr.f32.mxu0 0.0
          %1566 = vmatmul.mubr.f32.gmra.mrb[0].mxu0 %v1370
          %v1567 = vpop.f32.mrb[0].mxu0
          %v1568 = vadd.f32 0.0, %v1567
          %v1569 = vpop.f32.mrb[0].mxu0
          %1570 = vmatprep.mubr.f32.mxu0 0.0
          %1571 = vmatmul.mubr.f32.gmra.mrb[0].mxu0 %v1373
          %v1572 = vpop.f32.mrb[0].mxu0
          %v1573 = vadd.f32 0.0, %v1572
          %v1574 = vpop.f32.mrb[0].mxu0
          %1575 = vmatprep.mubr.f32.mxu0 0.0
          %1576 = vmatmul.mubr.f32.gmra.mrb[0].mxu0 %v1376
          %v1577 = vpop.f32.mrb[0].mxu0
          %v1578 = vadd.f32 0.0, %v1577
          %v1579 = vpop.f32.mrb[0].mxu0
          %1580 = vmatprep.mubr.f32.mxu0 0.0
          %1581 = vmatmul.mubr.f32.gmra.mrb[0].mxu0 %v1379
          %v1582 = vpop.f32.mrb[0].mxu0
          %v1583 = vadd.f32 0.0, %v1582
          %v1584 = vpop.f32.mrb[0].mxu0
          %1585 = vmatprep.mubr.f32.mxu0 0.0
          %1586 = vmatmul.mubr.f32.gmra.mrb[0].mxu0 %v1382
          %v1587 = vpop.f32.mrb[0].mxu0
          %v1588 = vadd.f32 0.0, %v1587
          %v1589 = vpop.f32.mrb[0].mxu0
          %1590 = vmatprep.mubr.f32.mxu0 0.0
          %1591 = vmatmul.mubr.f32.gmra.mrb[0].mxu0 %v1385
          %v1592 = vpop.f32.mrb[0].mxu0
          %v1593 = vadd.f32 0.0, %v1592
          %v1594 = vpop.f32.mrb[0].mxu0
          %1595 = vmatprep.mubr.f32.mxu0 0.0
          %1596 = vmatmul.mubr.f32.gmra.mrb[0].mxu0 %v1388
          %v1597 = vpop.f32.mrb[0].mxu0
          %v1598 = vadd.f32 0.0, %v1597
          %v1599 = vpop.f32.mrb[0].mxu0
          %1600 = vmatprep.mubr.f32.mxu0 0.0
          %1601 = vmatmul.mubr.f32.gmra.mrb[0].mxu0 %v1391
          %v1602 = vpop.f32.mrb[0].mxu0
          %v1603 = vadd.f32 0.0, %v1602
          %v1604 = vpop.f32.mrb[0].mxu0
          %1605 = vmatprep.mubr.f32.mxu0 0.0
          %1606 = vmatmul.mubr.f32.gmra.mrb[0].mxu0 %v1394
          %v1607 = vpop.f32.mrb[0].mxu0
          %v1608 = vadd.f32 0.0, %v1607
          %v1609 = vpop.f32.mrb[0].mxu0
          %1610 = vmatprep.mubr.f32.mxu0 0.0
          %1611 = vmatmul.mubr.f32.gmra.mrb[0].mxu0 %v1397
          %v1612 = vpop.f32.mrb[0].mxu0
          %v1613 = vadd.f32 0.0, %v1612
          %v1614 = vpop.f32.mrb[0].mxu0
          %1615 = vmatprep.mubr.f32.mxu0 0.0
          %1616 = vmatmul.mubr.f32.gmra.mrb[0].mxu0 %v1400
          %v1617 = vpop.f32.mrb[0].mxu0
          %v1618 = vadd.f32 0.0, %v1617
          %v1619 = vpop.f32.mrb[0].mxu0
          %1620 = vmatprep.mubr.f32.mxu0 0.0
          %1621 = vmatmul.mubr.f32.gmra.mrb[0].mxu0 %v1403
          %v1622 = vpop.f32.mrb[0].mxu0
          %v1623 = vadd.f32 0.0, %v1622
          %v1624 = vpop.f32.mrb[0].mxu0
          %1625 = vmatprep.mubr.f32.mxu0 0.0
          %1626 = vmatmul.mubr.f32.gmra.mrb[0].mxu0 %v1406
          %v1627 = vpop.f32.mrb[0].mxu0
          %v1628 = vadd.f32 0.0, %v1627
          %v1629 = vpop.f32.mrb[0].mxu0
          %1630 = vmatprep.mubr.f32.mxu0 0.0
          %1631 = vmatmul.mubr.f32.gmra.mrb[0].mxu0 %v1409
          %v1632 = vpop.f32.mrb[0].mxu0
          %v1633 = vadd.f32 0.0, %v1632
          %v1634 = vpop.f32.mrb[0].mxu0
          %1635 = vdwg.mxu0
          %1636 = vst [vmem:[%s424] sm:$0xff] %v1478
          %1637 = vst [vmem:[%s424 + $0x8] sm:$0xff] %v1483
          %1638 = vst [vmem:[%s424 + $0x10] sm:$0xff] %v1488
          %1639 = vst [vmem:[%s424 + $0x18] sm:$0xff] %v1493
          %1640 = vst [vmem:[%s424 + $0x20] sm:$0xff] %v1498
          %1641 = vst [vmem:[%s424 + $0x28] sm:$0xff] %v1503
          %1642 = vst [vmem:[%s424 + $0x30] sm:$0xff] %v1508
          %1643 = vst [vmem:[%s424 + $0x38] sm:$0xff] %v1513
          %1644 = vst [vmem:[%s424 + $0x40] sm:$0xff] %v1518
          %1645 = vst [vmem:[%s424 + $0x48] sm:$0xff] %v1523
          %1646 = vst [vmem:[%s424 + $0x50] sm:$0xff] %v1528
          %1647 = vst [vmem:[%s424 + $0x58] sm:$0xff] %v1533
          %1648 = vst [vmem:[%s424 + $0x60] sm:$0xff] %v1538
          %1649 = vst [vmem:[%s424 + $0x68] sm:$0xff] %v1543
          %1650 = vst [vmem:[%s424 + $0x70] sm:$0xff] %v1548
          %1651 = vst [vmem:[%s424 + $0x78] sm:$0xff] %v1553
          %1652 = vst [vmem:[%s424 + $0x80] sm:$0xff] %v1558
          %1653 = vst [vmem:[%s424 + $0x88] sm:$0xff] %v1563
          %1654 = vst [vmem:[%s424 + $0x90] sm:$0xff] %v1568
          %1655 = vst [vmem:[%s424 + $0x98] sm:$0xff] %v1573
          %1656 = vst [vmem:[%s424 + $0xa0] sm:$0xff] %v1578
          %1657 = vst [vmem:[%s424 + $0xa8] sm:$0xff] %v1583
          %1658 = vst [vmem:[%s424 + $0xb0] sm:$0xff] %v1588
          %1659 = vst [vmem:[%s424 + $0xb8] sm:$0xff] %v1593
          %1660 = vst [vmem:[%s424 + $0xc0] sm:$0xff] %v1598
          %1661 = vst [vmem:[%s424 + $0xc8] sm:$0xff] %v1603
          %1662 = vst [vmem:[%s424 + $0xd0] sm:$0xff] %v1608
          %1663 = vst [vmem:[%s424 + $0xd8] sm:$0xff] %v1613
          %1664 = vst [vmem:[%s424 + $0xe0] sm:$0xff] %v1618
          %1665 = vst [vmem:[%s424 + $0xe8] sm:$0xff] %v1623
          %1666 = vst [vmem:[%s424 + $0xf0] sm:$0xff] %v1628
          %1667 = vst [vmem:[%s424 + $0xf8] sm:$0xff] %v1633
        $region86: #{net_forward.2} parent=73 // pred_fallthru
          _
        %s1668 = smul.u32 32, %s20
        %p1669 = scmp.lt.s32.totalorder %s1668, 63
        %s1670 = scalar_select %p1669, %s1668, 63
        %s1671 = smul.addr %s1670, 8
        %s1672 = scalar_lea.vmem %s5, %s1671
        // Predicated region
        $region87: #{net_forward.2} parent=73 // pred_check
          %p1673 = pneg %p163
        $region88: #{net_forward.2} parent=73 // pred_check_branch
          %1675 = sbr.rel (%p1673) target = $region90
        $region89: #{net_forward.2} parent=73 // pred_region
          %s1676 = smul.u32 32, %s20
        $region90: #{net_forward.2} parent=73 // pred_fallthru
          _
      $region74: #{net_forward.2} parent=5 // pred_fallthru
        _
      %p1677 = scmp.le.s32.totalorder 2, %s11
      // Predicated region
      $region91: #{net_forward.2} parent=5 // pred_check
        %p1678 = pneg %p1677
      $region92: #{net_forward.2} parent=5 // pred_check_branch
        %1680 = sbr.rel (%p1678) target = $region94
      $region93: #{net_forward.2} parent=5 // pred_region
        %s1681 = ssub.s32 %s11, 2
        // Predicated region
        $region95: #{net_forward.2} parent=93 // pred_check
          %p1682 = pneg %p169
        $region96: #{net_forward.2} parent=93 // pred_check_branch
          %1684 = sbr.rel (%p1682) target = $region98
        $region97: #{net_forward.2} parent=93 // pred_region
          %s1685 = smul.u32 32, %s22
          %p1686 = scmp.lt.s32.totalorder %s1685, 63
          %s1687 = scalar_select %p1686, %s1685, 63
          %s1688 = smul.addr %s1687, 8
          %s1689 = scalar_lea.vmem %s5, %s1688
        $region98: #{net_forward.2} parent=93 // pred_fallthru
          _
      $region94: #{net_forward.2} parent=5 // pred_fallthru
        _
    $region6: #{net_forward.2} parent=1 // loop_footer
      %s15 = sadd.s32 1, %s11
    $region7: #{net_forward.2} parent=1 // loop_footer_branch
      %10 = sbr.rel target = $region3
    $region8: #{net_forward.2} parent=1 // loop_exit
      _

// kernel: net_forward.3
$region0: #{net_forward.3}
  #allocation0 [shape = 'u32[]', space=smem, size = 0x4, offset = 0x4, fixed_abs, tag = 'smem constant byte address 0x4 - core index']
  #allocation1 [shape = 'u32[144,128]{1,0:T(1,128)}', space=vmem, size = 0x12000, scoped, tag = 'internal scratch']
  #allocation2 [shape = 'f32[256,128]{1,0:T(8,128)}', space=vmem, size = 0x20000, scoped, tag = 'scratch operand']
  %s0 = inlined_call_operand.vmem [shape: bf16[512,512], index: 0, kind: input, shape index: {}]
  %s1 = inlined_call_operand.vmem [shape: f32[512,128], index: 1, kind: input, shape index: {}]
  %s2 = inlined_call_operand.vmem [shape: f32[1,128], index: 2, kind: input, shape index: {}]
  %s3 = inlined_call_operand.vmem [shape: f32[512,128], index: 3, kind: output, shape index: {}]
  %s4 = sld [smem:[#allocation0]]
  $region91: #{net_forward.3} parent=0
    _
  %s6 = ssub.s32 1, %s4
  %s7 = scalar_select 0, %s6, %s4
  $region1: #{net_forward.3} parent=0
    #allocation3 [shape = 'u8[262144]{0}', space=vmem, size = 0x40000, scoped, tag = 'input window, operand 0']
    loop: start=0, step=1, limit=6
    $region2: #{net_forward.3} parent=1 // loop_pre_header
      _
    $region3: #{net_forward.3} parent=1 // loop_header
      %s9 = sphi 0, %s13
      %p10 = scmp.ge.s32.totalorder %s9, 6
      %s16 = sphi 0, %s28
      %s17 = sphi 0, %s24
      %s18 = sphi 0, %s16
      %s19 = sphi 0, %s17
      %s20 = sphi 0, %s18
      %s21 = sphi 0, %s19
      %s33 = sphi 0, %s35
      %s36 = sphi 0, %s33
      %s37 = sphi 0, %s36
      %s53 = sphi 0, %s37
      %s59 = sphi 0, %s61
      %s62 = sphi 0, %s59
      %s63 = sphi 0, %s62
      %s79 = sphi 0, %s63
      %s83 = sphi 0, %s83
      %s85 = sphi 0, %s83
      %s86 = sphi 0, %s85
      %s100 = sphi 0, %s86
      %s106 = sphi 0, %s108
      %s109 = sphi 0, %s106
      %s110 = sphi 0, %s109
      %s126 = sphi 0, %s110
    $region4: #{net_forward.3} parent=1 // loop_header_branch
      %12 = sbr.rel (%p10) target = $region8
    $region5: #{net_forward.3} parent=1 // loop_body
      %s14 = ssub.s32 %s9, 1
      %s15 = ssub.s32 %s9, 2
      %s22 = sadd.s32 1, %s17
      %p23 = scmp.ge.s32.totalorder %s22, 2
      %s24 = scalar_select %p23, 0, %s22
      %s25 = sadd.s32 1, %s16
      %s26 = scalar_select %p23, %s25, %s16
      %p27 = scmp.ge.s32.totalorder %s26, 2
      %s28 = scalar_select %p27, 0, %s26
      %s29 = ssub.s32 %s16, %s28
      %s30 = ssub.s32 %s17, %s24
      %s31 = sor.u32 %s29, %s30
      %p32 = scmp.eq.s32.totalorder %s31, 0
      %s34 = sadd.s32 %s33, 1
      %s35 = scalar_select %p32, %s33, %s34
      %p38 = pneg %p32
      %p39 = scmp.eq.s32.totalorder %s9, 3
      %p40 = por %p38, %p39
      %p41 = scmp.ne.s32.totalorder %s33, %s36
      %p42 = scmp.eq.s32.totalorder %s9, 0
      %p43 = por %p41, %p42
      %p44 = scmp.ne.s32.totalorder %s33, %s36
      %p45 = scmp.eq.s32.totalorder %s14, 3
      %p46 = por %p44, %p45
      %p47 = scmp.ne.s32.totalorder %s36, %s37
      %p48 = scmp.eq.s32.totalorder %s14, 0
      %p49 = por %p47, %p48
      %p50 = scmp.ne.s32.totalorder %s36, %s37
      %p51 = scmp.eq.s32.totalorder %s15, 3
      %p52 = por %p50, %p51
      %p54 = scmp.ne.s32.totalorder %s37, %s53
      %p55 = scmp.eq.s32.totalorder %s15, 0
      %p56 = por %p54, %p55
      %s57 = ssub.s32 %s17, %s24
      %p58 = scmp.eq.s32.totalorder %s57, 0
      %s60 = sadd.s32 %s59, 1
      %s61 = scalar_select %p58, %s59, %s60
      %p64 = pneg %p58
      %p65 = scmp.eq.s32.totalorder %s9, 3
      %p66 = por %p64, %p65
      %p67 = scmp.ne.s32.totalorder %s59, %s62
      %p68 = scmp.eq.s32.totalorder %s9, 0
      %p69 = por %p67, %p68
      %p70 = scmp.ne.s32.totalorder %s59, %s62
      %p71 = scmp.eq.s32.totalorder %s14, 3
      %p72 = por %p70, %p71
      %p73 = scmp.ne.s32.totalorder %s62, %s63
      %p74 = scmp.eq.s32.totalorder %s14, 0
      %p75 = por %p73, %p74
      %p76 = scmp.ne.s32.totalorder %s62, %s63
      %p77 = scmp.eq.s32.totalorder %s15, 3
      %p78 = por %p76, %p77
      %p80 = scmp.ne.s32.totalorder %s63, %s79
      %p81 = scmp.eq.s32.totalorder %s15, 0
      %p82 = por %p80, %p81
      %s84 = sadd.s32 %s83, 1
      %p87 = scmp.eq.s32.totalorder %s9, 3
      %p88 = scmp.ne.s32.totalorder %s83, %s85
      %p89 = scmp.eq.s32.totalorder %s9, 0
      %p90 = por %p88, %p89
      %p91 = scmp.ne.s32.totalorder %s83, %s85
      %p92 = scmp.eq.s32.totalorder %s14, 3
      %p93 = por %p91, %p92
      %p94 = scmp.ne.s32.totalorder %s85, %s86
      %p95 = scmp.eq.s32.totalorder %s14, 0
      %p96 = por %p94, %p95
      %p97 = scmp.ne.s32.totalorder %s85, %s86
      %p98 = scmp.eq.s32.totalorder %s15, 3
      %p99 = por %p97, %p98
      %p101 = scmp.ne.s32.totalorder %s86, %s100
      %p102 = scmp.eq.s32.totalorder %s15, 0
      %p103 = por %p101, %p102
      %s104 = ssub.s32 %s16, %s28
      %p105 = scmp.eq.s32.totalorder %s104, 0
      %s107 = sadd.s32 %s106, 1
      %s108 = scalar_select %p105, %s106, %s107
      %p111 = pneg %p105
      %p112 = scmp.eq.s32.totalorder %s9, 3
      %p113 = por %p111, %p112
      %p114 = scmp.ne.s32.totalorder %s106, %s109
      %p115 = scmp.eq.s32.totalorder %s9, 0
      %p116 = por %p114, %p115
      %p117 = scmp.ne.s32.totalorder %s106, %s109
      %p118 = scmp.eq.s32.totalorder %s14, 3
      %p119 = por %p117, %p118
      %p120 = scmp.ne.s32.totalorder %s109, %s110
      %p121 = scmp.eq.s32.totalorder %s14, 0
      %p122 = por %p120, %p121
      %p123 = scmp.ne.s32.totalorder %s109, %s110
      %p124 = scmp.eq.s32.totalorder %s15, 3
      %p125 = por %p123, %p124
      %p127 = scmp.ne.s32.totalorder %s110, %s126
      %p128 = scmp.eq.s32.totalorder %s15, 0
      %p129 = por %p127, %p128
      %p130 = scmp.le.s32.totalorder 1, %s9
      %p131 = scmp.lt.s32.totalorder %s9, 5
      %p132 = pnand %p130, %p131
      %p133 = pneg %p132
      // Predicated region
      $region9: #{net_forward.3} parent=5 // pred_check
        _
      $region10: #{net_forward.3} parent=5 // pred_check_branch
        %135 = sbr.rel (%p132) target = $region12
      $region11: #{net_forward.3} parent=5 // pred_region
        %s136 = ssub.s32 %s9, 1
        // Predicated region
        $region13: #{net_forward.3} parent=11 // pred_check
          %p137 = pneg %p96
        $region14: #{net_forward.3} parent=11 // pred_check_branch
          %139 = sbr.rel (%p137) target = $region16
        $region15: #{net_forward.3} parent=11 // pred_region
          _
        $region16: #{net_forward.3} parent=11 // pred_fallthru
          _
      $region12: #{net_forward.3} parent=5 // pred_fallthru
        _
      %p140 = scmp.lt.s32.totalorder %s9, 4
      // Predicated region
      $region17: #{net_forward.3} parent=5 // pred_check
        %p141 = pneg %p140
      $region18: #{net_forward.3} parent=5 // pred_check_branch
        %143 = sbr.rel (%p141) target = $region20
      $region19: #{net_forward.3} parent=5 // pred_region
        // Predicated region
        $region21: #{net_forward.3} parent=19 // pred_check
          %p144 = pneg %p43
        $region22: #{net_forward.3} parent=19 // pred_check_branch
          %146 = sbr.rel (%p144) target = $region24
        $region23: #{net_forward.3} parent=19 // pred_region
          %s147 = sand.u32 %s33, 1
          %s148 = sand.u32 %s33, 1
          %s149 = smul.addr %s148, 256
          %s150 = scalar_lea.vmem [#allocation3], %s149
          %s151 = smul.u32 32, %s16
          %s152 = smul.u32 2, %s17
          %s153 = smul.addr %s151, 4
          %s154 = sadd.s32 %s152, %s153
          %s155 = smul.addr %s154, 4
          %s156 = scalar_lea.vmem %s0, %s155
          // Predicated region
          $region25: #{net_forward.3} parent=23 // pred_check
            _
          $region26: #{net_forward.3} parent=23 // pred_check_branch
            %158 = sbr.rel (0) target = $region28
          $region27: #{net_forward.3} parent=23 // pred_region
            // Predicated region
            $region29: #{net_forward.3} parent=27 // pred_check
              _
            $region30: #{net_forward.3} parent=27 // pred_check_branch
              %160 = sbr.rel (0) target = $region32
            $region31: #{net_forward.3} parent=27 // pred_region
              // Predicated region
              $region44: #{net_forward.3} parent=31 // pred_check
                _
              $region45: #{net_forward.3} parent=31 // pred_check_branch
                %237 = sbr.rel (0) target = $region47
              $region46: #{net_forward.3} parent=31 // pred_region
                loop: start=0, step=1, limit=1
                $region48: #{net_forward.3} parent=46 // loop_pre_header
                  _
                $region49: #{net_forward.3} parent=46 // loop_header
                  %s239 = sphi 0, %s243
                  %p240 = scmp.ge.s32.totalorder %s239, 1
                  %s244 = sphi %s156, %s156
                  %s245 = sphi %s150, %s150
                $region50: #{net_forward.3} parent=46 // loop_header_branch
                  %242 = sbr.rel (%p240) target = $region54
                $region51: #{net_forward.3} parent=46 // loop_body
                  %v246 = vld [vmem:[%s244] sm:$0xff]
                  %247 = vst [vmem:[%s245] sm:$0xff] %v246
                  %v248 = vld [vmem:[%s244 + $0x10] sm:$0xff]
                  %249 = vst [vmem:[%s245 + $0x8] sm:$0xff] %v248
                  %v250 = vld [vmem:[%s244 + $0x20] sm:$0xff]
                  %251 = vst [vmem:[%s245 + $0x10] sm:$0xff] %v250
                  %v252 = vld [vmem:[%s244 + $0x30] sm:$0xff]
                  %253 = vst [vmem:[%s245 + $0x18] sm:$0xff] %v252
                  %v254 = vld [vmem:[%s244 + $0x40] sm:$0xff]
                  %255 = vst [vmem:[%s245 + $0x20] sm:$0xff] %v254
                  %v256 = vld [vmem:[%s244 + $0x50] sm:$0xff]
                  %257 = vst [vmem:[%s245 + $0x28] sm:$0xff] %v256
                  %v258 = vld [vmem:[%s244 + $0x60] sm:$0xff]
                  %259 = vst [vmem:[%s245 + $0x30] sm:$0xff] %v258
                  %v260 = vld [vmem:[%s244 + $0x70] sm:$0xff]
                  %261 = vst [vmem:[%s245 + $0x38] sm:$0xff] %v260
                  %v262 = vld [vmem:[%s244 + $0x80] sm:$0xff]
                  %263 = vst [vmem:[%s245 + $0x40] sm:$0xff] %v262
                  %v264 = vld [vmem:[%s244 + $0x90] sm:$0xff]
                  %265 = vst [vmem:[%s245 + $0x48] sm:$0xff] %v264
                  %v266 = vld [vmem:[%s244 + $0xa0] sm:$0xff]
                  %267 = vst [vmem:[%s245 + $0x50] sm:$0xff] %v266
                  %v268 = vld [vmem:[%s244 + $0xb0] sm:$0xff]
                  %269 = vst [vmem:[%s245 + $0x58] sm:$0xff] %v268
                  %v270 = vld [vmem:[%s244 + $0xc0] sm:$0xff]
                  %271 = vst [vmem:[%s245 + $0x60] sm:$0xff] %v270
                  %v272 = vld [vmem:[%s244 + $0xd0] sm:$0xff]
                  %273 = vst [vmem:[%s245 + $0x68] sm:$0xff] %v272
                  %v274 = vld [vmem:[%s244 + $0xe0] sm:$0xff]
                  %275 = vst [vmem:[%s245 + $0x70] sm:$0xff] %v274
                  %v276 = vld [vmem:[%s244 + $0xf0] sm:$0xff]
                  %277 = vst [vmem:[%s245 + $0x78] sm:$0xff] %v276
                  %v278 = vld [vmem:[%s244 + $0x100] sm:$0xff]
                  %279 = vst [vmem:[%s245 + $0x80] sm:$0xff] %v278
                  %v280 = vld [vmem:[%s244 + $0x110] sm:$0xff]
                  %281 = vst [vmem:[%s245 + $0x88] sm:$0xff] %v280
                  %v282 = vld [vmem:[%s244 + $0x120] sm:$0xff]
                  %283 = vst [vmem:[%s245 + $0x90] sm:$0xff] %v282
                  %v284 = vld [vmem:[%s244 + $0x130] sm:$0xff]
                  %285 = vst [vmem:[%s245 + $0x98] sm:$0xff] %v284
                  %v286 = vld [vmem:[%s244 + $0x140] sm:$0xff]
                  %287 = vst [vmem:[%s245 + $0xa0] sm:$0xff] %v286
                  %v288 = vld [vmem:[%s244 + $0x150] sm:$0xff]
                  %289 = vst [vmem:[%s245 + $0xa8] sm:$0xff] %v288
                  %v290 = vld [vmem:[%s244 + $0x160] sm:$0xff]
                  %291 = vst [vmem:[%s245 + $0xb0] sm:$0xff] %v290
                  %v292 = vld [vmem:[%s244 + $0x170] sm:$0xff]
                  %293 = vst [vmem:[%s245 + $0xb8] sm:$0xff] %v292
                  %v294 = vld [vmem:[%s244 + $0x180] sm:$0xff]
                  %295 = vst [vmem:[%s245 + $0xc0] sm:$0xff] %v294
                  %v296 = vld [vmem:[%s244 + $0x190] sm:$0xff]
                  %297 = vst [vmem:[%s245 + $0xc8] sm:$0xff] %v296
                  %v298 = vld [vmem:[%s244 + $0x1a0] sm:$0xff]
                  %299 = vst [vmem:[%s245 + $0xd0] sm:$0xff] %v298
                  %v300 = vld [vmem:[%s244 + $0x1b0] sm:$0xff]
                  %301 = vst [vmem:[%s245 + $0xd8] sm:$0xff] %v300
                  %v302 = vld [vmem:[%s244 + $0x1c0] sm:$0xff]
                  %303 = vst [vmem:[%s245 + $0xe0] sm:$0xff] %v302
                  %v304 = vld [vmem:[%s244 + $0x1d0] sm:$0xff]
                  %305 = vst [vmem:[%s245 + $0xe8] sm:$0xff] %v304
                  %v306 = vld [vmem:[%s244 + $0x1e0] sm:$0xff]
                  %307 = vst [vmem:[%s245 + $0xf0] sm:$0xff] %v306
                  %v308 = vld [vmem:[%s244 + $0x1f0] sm:$0xff]
                  %309 = vst [vmem:[%s245 + $0xf8] sm:$0xff] %v308
                $region52: #{net_forward.3} parent=46 // loop_footer
                  %s243 = sadd.s32 1, %s239
                $region53: #{net_forward.3} parent=46 // loop_footer_branch
                  %238 = sbr.rel target = $region49
                $region54: #{net_forward.3} parent=46 // loop_exit
                  _
              $region47: #{net_forward.3} parent=31 // pred_fallthru
                _
              // Predicated region
              $region55: #{net_forward.3} parent=31 // pred_check
                _
              $region56: #{net_forward.3} parent=31 // pred_check_branch
                %311 = sbr.rel target = $region58
              $region57: #{net_forward.3} parent=31 // pred_region
                _
              $region58: #{net_forward.3} parent=31 // pred_fallthru
                _
            $region32: #{net_forward.3} parent=27 // pred_fallthru
              _
            // Predicated region
            $region33: #{net_forward.3} parent=27 // pred_check
              _
            $region34: #{net_forward.3} parent=27 // pred_check_branch
              %162 = sbr.rel target = $region36
            $region35: #{net_forward.3} parent=27 // pred_region
              loop: start=0, step=1, limit=1
              $region37: #{net_forward.3} parent=35 // loop_pre_header
                _
              $region38: #{net_forward.3} parent=35 // loop_header
                %s165 = sphi 0, %s169
                %p166 = scmp.ge.s32.totalorder %s165, 1
                %s170 = sphi %s156, %s156
                %s171 = sphi %s150, %s150
              $region39: #{net_forward.3} parent=35 // loop_header_branch
                %168 = sbr.rel (%p166) target = $region43
              $region40: #{net_forward.3} parent=35 // loop_body
                %v172 = vld [vmem:[%s170] sm:$0xff]
                %173 = vst [vmem:[%s171] sm:$0xff] %v172
                %v174 = vld [vmem:[%s170 + $0x10] sm:$0xff]
                %175 = vst [vmem:[%s171 + $0x8] sm:$0xff] %v174
                %v176 = vld [vmem:[%s170 + $0x20] sm:$0xff]
                %177 = vst [vmem:[%s171 + $0x10] sm:$0xff] %v176
                %v178 = vld [vmem:[%s170 + $0x30] sm:$0xff]
                %179 = vst [vmem:[%s171 + $0x18] sm:$0xff] %v178
                %v180 = vld [vmem:[%s170 + $0x40] sm:$0xff]
                %181 = vst [vmem:[%s171 + $0x20] sm:$0xff] %v180
                %v182 = vld [vmem:[%s170 + $0x50] sm:$0xff]
                %183 = vst [vmem:[%s171 + $0x28] sm:$0xff] %v182
                %v184 = vld [vmem:[%s170 + $0x60] sm:$0xff]
                %185 = vst [vmem:[%s171 + $0x30] sm:$0xff] %v184
                %v186 = vld [vmem:[%s170 + $0x70] sm:$0xff]
                %187 = vst [vmem:[%s171 + $0x38] sm:$0xff] %v186
                %v188 = vld [vmem:[%s170 + $0x80] sm:$0xff]
                %189 = vst [vmem:[%s171 + $0x40] sm:$0xff] %v188
                %v190 = vld [vmem:[%s170 + $0x90] sm:$0xff]
                %191 = vst [vmem:[%s171 + $0x48] sm:$0xff] %v190
                %v192 = vld [vmem:[%s170 + $0xa0] sm:$0xff]
                %193 = vst [vmem:[%s171 + $0x50] sm:$0xff] %v192
                %v194 = vld [vmem:[%s170 + $0xb0] sm:$0xff]
                %195 = vst [vmem:[%s171 + $0x58] sm:$0xff] %v194
                %v196 = vld [vmem:[%s170 + $0xc0] sm:$0xff]
                %197 = vst [vmem:[%s171 + $0x60] sm:$0xff] %v196
                %v198 = vld [vmem:[%s170 + $0xd0] sm:$0xff]
                %199 = vst [vmem:[%s171 + $0x68] sm:$0xff] %v198
                %v200 = vld [vmem:[%s170 + $0xe0] sm:$0xff]
                %201 = vst [vmem:[%s171 + $0x70] sm:$0xff] %v200
                %v202 = vld [vmem:[%s170 + $0xf0] sm:$0xff]
                %203 = vst [vmem:[%s171 + $0x78] sm:$0xff] %v202
                %v204 = vld [vmem:[%s170 + $0x100] sm:$0xff]
                %205 = vst [vmem:[%s171 + $0x80] sm:$0xff] %v204
                %v206 = vld [vmem:[%s170 + $0x110] sm:$0xff]
                %207 = vst [vmem:[%s171 + $0x88] sm:$0xff] %v206
                %v208 = vld [vmem:[%s170 + $0x120] sm:$0xff]
                %209 = vst [vmem:[%s171 + $0x90] sm:$0xff] %v208
                %v210 = vld [vmem:[%s170 + $0x130] sm:$0xff]
                %211 = vst [vmem:[%s171 + $0x98] sm:$0xff] %v210
                %v212 = vld [vmem:[%s170 + $0x140] sm:$0xff]
                %213 = vst [vmem:[%s171 + $0xa0] sm:$0xff] %v212
                %v214 = vld [vmem:[%s170 + $0x150] sm:$0xff]
                %215 = vst [vmem:[%s171 + $0xa8] sm:$0xff] %v214
                %v216 = vld [vmem:[%s170 + $0x160] sm:$0xff]
                %217 = vst [vmem:[%s171 + $0xb0] sm:$0xff] %v216
                %v218 = vld [vmem:[%s170 + $0x170] sm:$0xff]
                %219 = vst [vmem:[%s171 + $0xb8] sm:$0xff] %v218
                %v220 = vld [vmem:[%s170 + $0x180] sm:$0xff]
                %221 = vst [vmem:[%s171 + $0xc0] sm:$0xff] %v220
                %v222 = vld [vmem:[%s170 + $0x190] sm:$0xff]
                %223 = vst [vmem:[%s171 + $0xc8] sm:$0xff] %v222
                %v224 = vld [vmem:[%s170 + $0x1a0] sm:$0xff]
                %225 = vst [vmem:[%s171 + $0xd0] sm:$0xff] %v224
                %v226 = vld [vmem:[%s170 + $0x1b0] sm:$0xff]
                %227 = vst [vmem:[%s171 + $0xd8] sm:$0xff] %v226
                %v228 = vld [vmem:[%s170 + $0x1c0] sm:$0xff]
                %229 = vst [vmem:[%s171 + $0xe0] sm:$0xff] %v228
                %v230 = vld [vmem:[%s170 + $0x1d0] sm:$0xff]
                %231 = vst [vmem:[%s171 + $0xe8] sm:$0xff] %v230
                %v232 = vld [vmem:[%s170 + $0x1e0] sm:$0xff]
                %233 = vst [vmem:[%s171 + $0xf0] sm:$0xff] %v232
                %v234 = vld [vmem:[%s170 + $0x1f0] sm:$0xff]
                %235 = vst [vmem:[%s171 + $0xf8] sm:$0xff] %v234
              $region41: #{net_forward.3} parent=35 // loop_footer
                %s169 = sadd.s32 1, %s165
              $region42: #{net_forward.3} parent=35 // loop_footer_branch
                %164 = sbr.rel target = $region38
              $region43: #{net_forward.3} parent=35 // loop_exit
                _
            $region36: #{net_forward.3} parent=27 // pred_fallthru
              _
          $region28: #{net_forward.3} parent=23 // pred_fallthru
            _
          %312 = vnop
        $region24: #{net_forward.3} parent=19 // pred_fallthru
          _
        // Predicated region
        $region59: #{net_forward.3} parent=19 // pred_check
          %p313 = pneg %p69
        $region60: #{net_forward.3} parent=19 // pred_check_branch
          %315 = sbr.rel (%p313) target = $region62
        $region61: #{net_forward.3} parent=19 // pred_region
          %s316 = smul.u32 32, %s17
          %p317 = scmp.lt.s32.totalorder %s316, 63
          %s318 = scalar_select %p317, %s316, 63
          %s319 = smul.addr %s318, 8
          %s320 = scalar_lea.vmem %s1, %s319
          %s321 = smul.u32 32, %s17
        $region62: #{net_forward.3} parent=19 // pred_fallthru
          _
      $region20: #{net_forward.3} parent=5 // pred_fallthru
        _
      %p322 = scmp.le.s32.totalorder 1, %s9
      %p323 = scmp.lt.s32.totalorder %s9, 5
      %p324 = pnand %p322, %p323
      %p325 = pneg %p324
      // Predicated region
      $region63: #{net_forward.3} parent=5 // pred_check
        _
      $region64: #{net_forward.3} parent=5 // pred_check_branch
        %327 = sbr.rel (%p324) target = $region66
      $region65: #{net_forward.3} parent=5 // pred_region
        %s328 = ssub.s32 %s9, 1
        %s329 = sand.u32 %s36, 1
        %s330 = sand.u32 %s36, 1
        %s331 = smul.addr %s330, 256
        %s332 = scalar_lea.vmem [#allocation3], %s331
        // Predicated region
        $region67: #{net_forward.3} parent=65 // pred_check
          %p333 = pneg %p49
        $region68: #{net_forward.3} parent=65 // pred_check_branch
          %335 = sbr.rel (%p333) target = $region70
        $region69: #{net_forward.3} parent=65 // pred_region
          _
        $region70: #{net_forward.3} parent=65 // pred_fallthru
          _
        %s336 = sand.u32 %s36, 1
        %s337 = sand.u32 %s36, 1
        %s338 = smul.addr %s337, 256
        %s339 = scalar_lea.vmem [#allocation3], %s338
        %p340 = pneg %p49
        %p341 = pneg %p46
        %s342 = smul.u32 32, %s19
        %p343 = scmp.lt.s32.totalorder %s342, 63
        %s344 = scalar_select %p343, %s342, 63
        %s345 = smul.addr %s344, 8
        %s346 = scalar_lea.vmem %s1, %s345
        %p347 = pneg %p75
        %p348 = pneg %p72
        %p349 = pneg %p96
        %p350 = pneg %p93
        %p351 = pneg %p122
        %p352 = pneg %p119
        %s353 = smul.u32 32, %s18
        %p354 = scmp.lt.s32.totalorder %s353, 63
        %s355 = scalar_select %p354, %s353, 63
        %s356 = smul.addr %s355, 8
        %s357 = scalar_lea.vmem %s3, %s356
        %s358 = smul.u32 32, %s18
        %s359 = smul.u32 2, %s19
        %s360 = smul.u32 32, %s19
        %p361 = scmp.lt.s32.totalorder %s360, 63
        %s362 = scalar_select %p361, %s360, 63
        %s363 = smul.addr %s362, 8
        %s364 = scalar_lea.vmem %s1, %s363
        %s365 = smul.u32 32, %s19
        %s366 = smul.u32 32, %s18
        %p367 = scmp.lt.s32.totalorder %s366, 63
        %s368 = scalar_select %p367, %s366, 63
        %s369 = smul.addr %s368, 8
        %s370 = scalar_lea.vmem %s3, %s369
        %s371 = smul.u32 32, %s18
        %p372 = scmp.eq.s32.totalorder %s19, 0
        // Predicated region
        $region71: #{net_forward.3} parent=65 // pred_check
          %p373 = pneg %p372
        $region72: #{net_forward.3} parent=65 // pred_check_branch
          %375 = sbr.rel (%p373) target = $region74
        $region73: #{net_forward.3} parent=65 // pred_region
          %376 = vst [vmem:[#allocation2] sm:$0xff] 0.0
          %377 = vst [vmem:[#allocation2 + $0x8] sm:$0xff] 0.0
          %378 = vst [vmem:[#allocation2 + $0x10] sm:$0xff] 0.0
          %379 = vst [vmem:[#allocation2 + $0x18] sm:$0xff] 0.0
          %380 = vst [vmem:[#allocation2 + $0x20] sm:$0xff] 0.0
          %381 = vst [vmem:[#allocation2 + $0x28] sm:$0xff] 0.0
          %382 = vst [vmem:[#allocation2 + $0x30] sm:$0xff] 0.0
          %383 = vst [vmem:[#allocation2 + $0x38] sm:$0xff] 0.0
          %384 = vst [vmem:[#allocation2 + $0x40] sm:$0xff] 0.0
          %385 = vst [vmem:[#allocation2 + $0x48] sm:$0xff] 0.0
          %386 = vst [vmem:[#allocation2 + $0x50] sm:$0xff] 0.0
          %387 = vst [vmem:[#allocation2 + $0x58] sm:$0xff] 0.0
          %388 = vst [vmem:[#allocation2 + $0x60] sm:$0xff] 0.0
          %389 = vst [vmem:[#allocation2 + $0x68] sm:$0xff] 0.0
          %390 = vst [vmem:[#allocation2 + $0x70] sm:$0xff] 0.0
          %391 = vst [vmem:[#allocation2 + $0x78] sm:$0xff] 0.0
          %392 = vst [vmem:[#allocation2 + $0x80] sm:$0xff] 0.0
          %393 = vst [vmem:[#allocation2 + $0x88] sm:$0xff] 0.0
          %394 = vst [vmem:[#allocation2 + $0x90] sm:$0xff] 0.0
          %395 = vst [vmem:[#allocation2 + $0x98] sm:$0xff] 0.0
          %396 = vst [vmem:[#allocation2 + $0xa0] sm:$0xff] 0.0
          %397 = vst [vmem:[#allocation2 + $0xa8] sm:$0xff] 0.0
          %398 = vst [vmem:[#allocation2 + $0xb0] sm:$0xff] 0.0
          %399 = vst [vmem:[#allocation2 + $0xb8] sm:$0xff] 0.0
          %400 = vst [vmem:[#allocation2 + $0xc0] sm:$0xff] 0.0
          %401 = vst [vmem:[#allocation2 + $0xc8] sm:$0xff] 0.0
          %402 = vst [vmem:[#allocation2 + $0xd0] sm:$0xff] 0.0
          %403 = vst [vmem:[#allocation2 + $0xd8] sm:$0xff] 0.0
          %404 = vst [vmem:[#allocation2 + $0xe0] sm:$0xff] 0.0
          %405 = vst [vmem:[#allocation2 + $0xe8] sm:$0xff] 0.0
          %406 = vst [vmem:[#allocation2 + $0xf0] sm:$0xff] 0.0
          %407 = vst [vmem:[#allocation2 + $0xf8] sm:$0xff] 0.0
        $region74: #{net_forward.3} parent=65 // pred_fallthru
          _
        %v408 = vld [vmem:[%s332] sm:$0xff]
        %v409 = vld [vmem:[%s332 + $0x8] sm:$0xff]
        %v410 = vld [vmem:[%s332 + $0x10] sm:$0xff]
        %v411 = vld [vmem:[%s332 + $0x18] sm:$0xff]
        %v412 = vld [vmem:[%s332 + $0x20] sm:$0xff]
        %v413 = vld [vmem:[%s332 + $0x28] sm:$0xff]
        %v414 = vld [vmem:[%s332 + $0x30] sm:$0xff]
        %v415 = vld [vmem:[%s332 + $0x38] sm:$0xff]
        %v416 = vld [vmem:[%s332 + $0x40] sm:$0xff]
        %v417 = vld [vmem:[%s332 + $0x48] sm:$0xff]
        %v418 = vld [vmem:[%s332 + $0x50] sm:$0xff]
        %v419 = vld [vmem:[%s332 + $0x58] sm:$0xff]
        %v420 = vld [vmem:[%s332 + $0x60] sm:$0xff]
        %v421 = vld [vmem:[%s332 + $0x68] sm:$0xff]
        %v422 = vld [vmem:[%s332 + $0x70] sm:$0xff]
        %v423 = vld [vmem:[%s332 + $0x78] sm:$0xff]
        %v424 = vld [vmem:[%s332 + $0x80] sm:$0xff]
        %v425 = vld [vmem:[%s332 + $0x88] sm:$0xff]
        %v426 = vld [vmem:[%s332 + $0x90] sm:$0xff]
        %v427 = vld [vmem:[%s332 + $0x98] sm:$0xff]
        %v428 = vld [vmem:[%s332 + $0xa0] sm:$0xff]
        %v429 = vld [vmem:[%s332 + $0xa8] sm:$0xff]
        %v430 = vld [vmem:[%s332 + $0xb0] sm:$0xff]
        %v431 = vld [vmem:[%s332 + $0xb8] sm:$0xff]
        %v432 = vld [vmem:[%s332 + $0xc0] sm:$0xff]
        %v433 = vld [vmem:[%s332 + $0xc8] sm:$0xff]
        %v434 = vld [vmem:[%s332 + $0xd0] sm:$0xff]
        %v435 = vld [vmem:[%s332 + $0xd8] sm:$0xff]
        %v436 = vld [vmem:[%s332 + $0xe0] sm:$0xff]
        %v437 = vld [vmem:[%s332 + $0xe8] sm:$0xff]
        %v438 = vld [vmem:[%s332 + $0xf0] sm:$0xff]
        %v439 = vld [vmem:[%s332 + $0xf8] sm:$0xff]
        %v440 = vunpack.c.l.bf16 %v408
        %v441 = vunpack.c.h.bf16 %v408
        %v442 = vunpack.c.l.bf16 %v409
        %v443 = vunpack.c.h.bf16 %v409
        %v444 = vunpack.c.l.bf16 %v410
        %v445 = vunpack.c.h.bf16 %v410
        %v446 = vunpack.c.l.bf16 %v411
        %v447 = vunpack.c.h.bf16 %v411
        %v448 = vunpack.c.l.bf16 %v412
        %v449 = vunpack.c.h.bf16 %v412
        %v450 = vunpack.c.l.bf16 %v413
        %v451 = vunpack.c.h.bf16 %v413
        %v452 = vunpack.c.l.bf16 %v414
        %v453 = vunpack.c.h.bf16 %v414
        %v454 = vunpack.c.l.bf16 %v415
        %v455 = vunpack.c.h.bf16 %v415
        %v456 = vunpack.c.l.bf16 %v416
        %v457 = vunpack.c.h.bf16 %v416
        %v458 = vunpack.c.l.bf16 %v417
        %v459 = vunpack.c.h.bf16 %v417
        %v460 = vunpack.c.l.bf16 %v418
        %v461 = vunpack.c.h.bf16 %v418
        %v462 = vunpack.c.l.bf16 %v419
        %v463 = vunpack.c.h.bf16 %v419
        %v464 = vunpack.c.l.bf16 %v420
        %v465 = vunpack.c.h.bf16 %v420
        %v466 = vunpack.c.l.bf16 %v421
        %v467 = vunpack.c.h.bf16 %v421
        %v468 = vunpack.c.l.bf16 %v422
        %v469 = vunpack.c.h.bf16 %v422
        %v470 = vunpack.c.l.bf16 %v423
        %v471 = vunpack.c.h.bf16 %v423
        %v472 = vunpack.c.l.bf16 %v424
        %v473 = vunpack.c.h.bf16 %v424
        %v474 = vunpack.c.l.bf16 %v425
        %v475 = vunpack.c.h.bf16 %v425
        %v476 = vunpack.c.l.bf16 %v426
        %v477 = vunpack.c.h.bf16 %v426
        %v478 = vunpack.c.l.bf16 %v427
        %v479 = vunpack.c.h.bf16 %v427
        %v480 = vunpack.c.l.bf16 %v428
        %v481 = vunpack.c.h.bf16 %v428
        %v482 = vunpack.c.l.bf16 %v429
        %v483 = vunpack.c.h.bf16 %v429
        %v484 = vunpack.c.l.bf16 %v430
        %v485 = vunpack.c.h.bf16 %v430
        %v486 = vunpack.c.l.bf16 %v431
        %v487 = vunpack.c.h.bf16 %v431
        %v488 = vunpack.c.l.bf16 %v432
        %v489 = vunpack.c.h.bf16 %v432
        %v490 = vunpack.c.l.bf16 %v433
        %v491 = vunpack.c.h.bf16 %v433
        %v492 = vunpack.c.l.bf16 %v434
        %v493 = vunpack.c.h.bf16 %v434
        %v494 = vunpack.c.l.bf16 %v435
        %v495 = vunpack.c.h.bf16 %v435
        %v496 = vunpack.c.l.bf16 %v436
        %v497 = vunpack.c.h.bf16 %v436
        %v498 = vunpack.c.l.bf16 %v437
        %v499 = vunpack.c.h.bf16 %v437
        %v500 = vunpack.c.l.bf16 %v438
        %v501 = vunpack.c.h.bf16 %v438
        %v502 = vunpack.c.l.bf16 %v439
        %v503 = vunpack.c.h.bf16 %v439
        %v504 = vld [vmem:[#allocation2] sm:$0xff]
        %v505 = vld [vmem:[#allocation2 + $0x8] sm:$0xff]
        %v506 = vld [vmem:[#allocation2 + $0x10] sm:$0xff]
        %v507 = vld [vmem:[#allocation2 + $0x18] sm:$0xff]
        %v508 = vld [vmem:[#allocation2 + $0x20] sm:$0xff]
        %v509 = vld [vmem:[#allocation2 + $0x28] sm:$0xff]
        %v510 = vld [vmem:[#allocation2 + $0x30] sm:$0xff]
        %v511 = vld [vmem:[#allocation2 + $0x38] sm:$0xff]
        %v512 = vld [vmem:[#allocation2 + $0x40] sm:$0xff]
        %v513 = vld [vmem:[#allocation2 + $0x48] sm:$0xff]
        %v514 = vld [vmem:[#allocation2 + $0x50] sm:$0xff]
        %v515 = vld [vmem:[#allocation2 + $0x58] sm:$0xff]
        %v516 = vld [vmem:[#allocation2 + $0x60] sm:$0xff]
        %v517 = vld [vmem:[#allocation2 + $0x68] sm:$0xff]
        %v518 = vld [vmem:[#allocation2 + $0x70] sm:$0xff]
        %v519 = vld [vmem:[#allocation2 + $0x78] sm:$0xff]
        %v520 = vld [vmem:[#allocation2 + $0x80] sm:$0xff]
        %v521 = vld [vmem:[#allocation2 + $0x88] sm:$0xff]
        %v522 = vld [vmem:[#allocation2 + $0x90] sm:$0xff]
        %v523 = vld [vmem:[#allocation2 + $0x98] sm:$0xff]
        %v524 = vld [vmem:[#allocation2 + $0xa0] sm:$0xff]
        %v525 = vld [vmem:[#allocation2 + $0xa8] sm:$0xff]
        %v526 = vld [vmem:[#allocation2 + $0xb0] sm:$0xff]
        %v527 = vld [vmem:[#allocation2 + $0xb8] sm:$0xff]
        %v528 = vld [vmem:[#allocation2 + $0xc0] sm:$0xff]
        %v529 = vld [vmem:[#allocation2 + $0xc8] sm:$0xff]
        %v530 = vld [vmem:[#allocation2 + $0xd0] sm:$0xff]
        %v531 = vld [vmem:[#allocation2 + $0xd8] sm:$0xff]
        %v532 = vld [vmem:[#allocation2 + $0xe0] sm:$0xff]
        %v533 = vld [vmem:[#allocation2 + $0xe8] sm:$0xff]
        %v534 = vld [vmem:[#allocation2 + $0xf0] sm:$0xff]
        %v535 = vld [vmem:[#allocation2 + $0xf8] sm:$0xff]
        %v536 = vld [vmem:[%s364] sm:$0xff]
        %v537 = vld [vmem:[%s364 + $0x8] sm:$0xff]
        %v538 = vld [vmem:[%s364 + $0x10] sm:$0xff]
        %v539 = vld [vmem:[%s364 + $0x18] sm:$0xff]
        %v540 = vld [vmem:[%s364 + $0x20] sm:$0xff]
        %v541 = vld [vmem:[%s364 + $0x28] sm:$0xff]
        %v542 = vld [vmem:[%s364 + $0x30] sm:$0xff]
        %v543 = vld [vmem:[%s364 + $0x38] sm:$0xff]
        %v544 = vld [vmem:[%s364 + $0x40] sm:$0xff]
        %v545 = vld [vmem:[%s364 + $0x48] sm:$0xff]
        %v546 = vld [vmem:[%s364 + $0x50] sm:$0xff]
        %v547 = vld [vmem:[%s364 + $0x58] sm:$0xff]
        %v548 = vld [vmem:[%s364 + $0x60] sm:$0xff]
        %v549 = vld [vmem:[%s364 + $0x68] sm:$0xff]
        %v550 = vld [vmem:[%s364 + $0x70] sm:$0xff]
        %v551 = vld [vmem:[%s364 + $0x78] sm:$0xff]
        %v552 = vld [vmem:[%s364 + $0x80] sm:$0xff]
        %v553 = vld [vmem:[%s364 + $0x88] sm:$0xff]
        %v554 = vld [vmem:[%s364 + $0x90] sm:$0xff]
        %v555 = vld [vmem:[%s364 + $0x98] sm:$0xff]
        %v556 = vld [vmem:[%s364 + $0xa0] sm:$0xff]
        %v557 = vld [vmem:[%s364 + $0xa8] sm:$0xff]
        %v558 = vld [vmem:[%s364 + $0xb0] sm:$0xff]
        %v559 = vld [vmem:[%s364 + $0xb8] sm:$0xff]
        %v560 = vld [vmem:[%s364 + $0xc0] sm:$0xff]
        %v561 = vld [vmem:[%s364 + $0xc8] sm:$0xff]
        %v562 = vld [vmem:[%s364 + $0xd0] sm:$0xff]
        %v563 = vld [vmem:[%s364 + $0xd8] sm:$0xff]
        %v564 = vld [vmem:[%s364 + $0xe0] sm:$0xff]
        %v565 = vld [vmem:[%s364 + $0xe8] sm:$0xff]
        %v566 = vld [vmem:[%s364 + $0xf0] sm:$0xff]
        %v567 = vld [vmem:[%s364 + $0xf8] sm:$0xff]
        %568 = vmatprep.subr.mxu0 0.0
        %569 = vmatpush1.msra.mxu0 %v536
        %570 = vmatprep.subr.mxu0 0.0
        %571 = vmatpush1.msra.mxu0 %v537
        %572 = vmatprep.subr.mxu0 0.0
        %573 = vmatpush1.msra.mxu0 %v538
        %574 = vmatprep.subr.mxu0 0.0
        %575 = vmatpush1.msra.mxu0 %v539
        %576 = vmatprep.subr.mxu0 0.0
        %577 = vmatpush1.msra.mxu0 %v540
        %578 = vmatprep.subr.mxu0 0.0
        %579 = vmatpush1.msra.mxu0 %v541
        %580 = vmatprep.subr.mxu0 0.0
        %581 = vmatpush1.msra.mxu0 %v542
        %582 = vmatprep.subr.mxu0 0.0
        %583 = vmatpush1.msra.mxu0 %v543
        %584 = vmatprep.subr.mxu0 0.0
        %585 = vmatpush1.msra.mxu0 %v544
        %586 = vmatprep.subr.mxu0 0.0
        %587 = vmatpush1.msra.mxu0 %v545
        %588 = vmatprep.subr.mxu0 0.0
        %589 = vmatpush1.msra.mxu0 %v546
        %590 = vmatprep.subr.mxu0 0.0
        %591 = vmatpush1.msra.mxu0 %v547
        %592 = vmatprep.subr.mxu0 0.0
        %593 = vmatpush1.msra.mxu0 %v548
        %594 = vmatprep.subr.mxu0 0.0
        %595 = vmatpush1.msra.mxu0 %v549
        %596 = vmatprep.subr.mxu0 0.0
        %597 = vmatpush1.msra.mxu0 %v550
        %598 = vmatprep.subr.mxu0 0.0
        %599 = vmatpush1.msra.mxu0 %v551
        %600 = vmatprep.subr.mxu0 0.0
        %601 = vmatpush1.msra.mxu0 %v552
        %602 = vmatprep.subr.mxu0 0.0
        %603 = vmatpush1.msra.mxu0 %v553
        %604 = vmatprep.subr.mxu0 0.0
        %605 = vmatpush1.msra.mxu0 %v554
        %606 = vmatprep.subr.mxu0 0.0
        %607 = vmatpush1.msra.mxu0 %v555
        %608 = vmatprep.subr.mxu0 0.0
        %609 = vmatpush1.msra.mxu0 %v556
        %610 = vmatprep.subr.mxu0 0.0
        %611 = vmatpush1.msra.mxu0 %v557
        %612 = vmatprep.subr.mxu0 0.0
        %613 = vmatpush1.msra.mxu0 %v558
        %614 = vmatprep.subr.mxu0 0.0
        %615 = vmatpush1.msra.mxu0 %v559
        %616 = vmatprep.subr.mxu0 0.0
        %617 = vmatpush1.msra.mxu0 %v560
        %618 = vmatprep.subr.mxu0 0.0
        %619 = vmatpush1.msra.mxu0 %v561
        %620 = vmatprep.subr.mxu0 0.0
        %621 = vmatpush1.msra.mxu0 %v562
        %622 = vmatprep.subr.mxu0 0.0
        %623 = vmatpush1.msra.mxu0 %v563
        %624 = vmatprep.subr.mxu0 0.0
        %625 = vmatpush1.msra.mxu0 %v564
        %626 = vmatprep.subr.mxu0 0.0
        %627 = vmatpush1.msra.mxu0 %v565
        %628 = vmatprep.subr.mxu0 0.0
        %629 = vmatpush1.msra.mxu0 %v566
        %630 = vmatprep.subr.mxu0 0.0
        %631 = vmatpush1.msra.mxu0 %v567
        %632 = vmatprep.mubr.f32.mxu0 %v441
        %633 = vmatmul.mubr.f32.gmra.mrb[0].mxu0 %v440
        %v634 = vpop.f32.mrb[0].mxu0
        %v635 = vadd.f32 0.0, %v634
        %v636 = vpop.f32.mrb[0].mxu0
        %637 = vmatprep.mubr.f32.mxu0 %v443
        %638 = vmatmul.mubr.f32.gmra.mrb[0].mxu0 %v442
        %v639 = vpop.f32.mrb[0].mxu0
        %v640 = vadd.f32 0.0, %v639
        %v641 = vpop.f32.mrb[0].mxu0
        %642 = vmatprep.mubr.f32.mxu0 %v445
        %643 = vmatmul.mubr.f32.gmra.mrb[0].mxu0 %v444
        %v644 = vpop.f32.mrb[0].mxu0
        %v645 = vadd.f32 0.0, %v644
        %v646 = vpop.f32.mrb[0].mxu0
        %647 = vmatprep.mubr.f32.mxu0 %v447
        %648 = vmatmul.mubr.f32.gmra.mrb[0].mxu0 %v446
        %v649 = vpop.f32.mrb[0].mxu0
        %v650 = vadd.f32 0.0, %v649
        %v651 = vpop.f32.mrb[0].mxu0
        %652 = vmatprep.mubr.f32.mxu0 %v449
        %653 = vmatmul.mubr.f32.gmra.mrb[0].mxu0 %v448
        %v654 = vpop.f32.mrb[0].mxu0
        %v655 = vadd.f32 0.0, %v654
        %v656 = vpop.f32.mrb[0].mxu0
        %657 = vmatprep.mubr.f32.mxu0 %v451
        %658 = vmatmul.mubr.f32.gmra.mrb[0].mxu0 %v450
        %v659 = vpop.f32.mrb[0].mxu0
        %v660 = vadd.f32 0.0, %v659
        %v661 = vpop.f32.mrb[0].mxu0
        %662 = vmatprep.mubr.f32.mxu0 %v453
        %663 = vmatmul.mubr.f32.gmra.mrb[0].mxu0 %v452
        %v664 = vpop.f32.mrb[0].mxu0
        %v665 = vadd.f32 0.0, %v664
        %v666 = vpop.f32.mrb[0].mxu0
        %667 = vmatprep.mubr.f32.mxu0 %v455
        %668 = vmatmul.mubr.f32.gmra.mrb[0].mxu0 %v454
        %v669 = vpop.f32.mrb[0].mxu0
        %v670 = vadd.f32 0.0, %v669
        %v671 = vpop.f32.mrb[0].mxu0
        %672 = vmatprep.mubr.f32.mxu0 %v457
        %673 = vmatmul.mubr.f32.gmra.mrb[0].mxu0 %v456
        %v674 = vpop.f32.mrb[0].mxu0
        %v675 = vadd.f32 0.0, %v674
        %v676 = vpop.f32.mrb[0].mxu0
        %677 = vmatprep.mubr.f32.mxu0 %v459
        %678 = vmatmul.mubr.f32.gmra.mrb[0].mxu0 %v458
        %v679 = vpop.f32.mrb[0].mxu0
        %v680 = vadd.f32 0.0, %v679
        %v681 = vpop.f32.mrb[0].mxu0
        %682 = vmatprep.mubr.f32.mxu0 %v461
        %683 = vmatmul.mubr.f32.gmra.mrb[0].mxu0 %v460
        %v684 = vpop.f32.mrb[0].mxu0
        %v685 = vadd.f32 0.0, %v684
        %v686 = vpop.f32.mrb[0].mxu0
        %687 = vmatprep.mubr.f32.mxu0 %v463
        %688 = vmatmul.mubr.f32.gmra.mrb[0].mxu0 %v462
        %v689 = vpop.f32.mrb[0].mxu0
        %v690 = vadd.f32 0.0, %v689
        %v691 = vpop.f32.mrb[0].mxu0
        %692 = vmatprep.mubr.f32.mxu0 %v465
        %693 = vmatmul.mubr.f32.gmra.mrb[0].mxu0 %v464
        %v694 = vpop.f32.mrb[0].mxu0
        %v695 = vadd.f32 0.0, %v694
        %v696 = vpop.f32.mrb[0].mxu0
        %697 = vmatprep.mubr.f32.mxu0 %v467
        %698 = vmatmul.mubr.f32.gmra.mrb[0].mxu0 %v466
        %v699 = vpop.f32.mrb[0].mxu0
        %v700 = vadd.f32 0.0, %v699
        %v701 = vpop.f32.mrb[0].mxu0
        %702 = vmatprep.mubr.f32.mxu0 %v469
        %703 = vmatmul.mubr.f32.gmra.mrb[0].mxu0 %v468
        %v704 = vpop.f32.mrb[0].mxu0
        %v705 = vadd.f32 0.0, %v704
        %v706 = vpop.f32.mrb[0].mxu0
        %707 = vmatprep.mubr.f32.mxu0 %v471
        %708 = vmatmul.mubr.f32.gmra.mrb[0].mxu0 %v470
        %v709 = vpop.f32.mrb[0].mxu0
        %v710 = vadd.f32 0.0, %v709
        %v711 = vpop.f32.mrb[0].mxu0
        %712 = vmatprep.mubr.f32.mxu0 %v473
        %713 = vmatmul.mubr.f32.gmra.mrb[0].mxu0 %v472
        %v714 = vpop.f32.mrb[0].mxu0
        %v715 = vadd.f32 0.0, %v714
        %v716 = vpop.f32.mrb[0].mxu0
        %717 = vmatprep.mubr.f32.mxu0 %v475
        %718 = vmatmul.mubr.f32.gmra.mrb[0].mxu0 %v474
        %v719 = vpop.f32.mrb[0].mxu0
        %v720 = vadd.f32 0.0, %v719
        %v721 = vpop.f32.mrb[0].mxu0
        %722 = vmatprep.mubr.f32.mxu0 %v477
        %723 = vmatmul.mubr.f32.gmra.mrb[0].mxu0 %v476
        %v724 = vpop.f32.mrb[0].mxu0
        %v725 = vadd.f32 0.0, %v724
        %v726 = vpop.f32.mrb[0].mxu0
        %727 = vmatprep.mubr.f32.mxu0 %v479
        %728 = vmatmul.mubr.f32.gmra.mrb[0].mxu0 %v478
        %v729 = vpop.f32.mrb[0].mxu0
        %v730 = vadd.f32 0.0, %v729
        %v731 = vpop.f32.mrb[0].mxu0
        %732 = vmatprep.mubr.f32.mxu0 %v481
        %733 = vmatmul.mubr.f32.gmra.mrb[0].mxu0 %v480
        %v734 = vpop.f32.mrb[0].mxu0
        %v735 = vadd.f32 0.0, %v734
        %v736 = vpop.f32.mrb[0].mxu0
        %737 = vmatprep.mubr.f32.mxu0 %v483
        %738 = vmatmul.mubr.f32.gmra.mrb[0].mxu0 %v482
        %v739 = vpop.f32.mrb[0].mxu0
        %v740 = vadd.f32 0.0, %v739
        %v741 = vpop.f32.mrb[0].mxu0
        %742 = vmatprep.mubr.f32.mxu0 %v485
        %743 = vmatmul.mubr.f32.gmra.mrb[0].mxu0 %v484
        %v744 = vpop.f32.mrb[0].mxu0
        %v745 = vadd.f32 0.0, %v744
        %v746 = vpop.f32.mrb[0].mxu0
        %747 = vmatprep.mubr.f32.mxu0 %v487
        %748 = vmatmul.mubr.f32.gmra.mrb[0].mxu0 %v486
        %v749 = vpop.f32.mrb[0].mxu0
        %v750 = vadd.f32 0.0, %v749
        %v751 = vpop.f32.mrb[0].mxu0
        %752 = vmatprep.mubr.f32.mxu0 %v489
        %753 = vmatmul.mubr.f32.gmra.mrb[0].mxu0 %v488
        %v754 = vpop.f32.mrb[0].mxu0
        %v755 = vadd.f32 0.0, %v754
        %v756 = vpop.f32.mrb[0].mxu0
        %757 = vmatprep.mubr.f32.mxu0 %v491
        %758 = vmatmul.mubr.f32.gmra.mrb[0].mxu0 %v490
        %v759 = vpop.f32.mrb[0].mxu0
        %v760 = vadd.f32 0.0, %v759
        %v761 = vpop.f32.mrb[0].mxu0
        %762 = vmatprep.mubr.f32.mxu0 %v493
        %763 = vmatmul.mubr.f32.gmra.mrb[0].mxu0 %v492
        %v764 = vpop.f32.mrb[0].mxu0
        %v765 = vadd.f32 0.0, %v764
        %v766 = vpop.f32.mrb[0].mxu0
        %767 = vmatprep.mubr.f32.mxu0 %v495
        %768 = vmatmul.mubr.f32.gmra.mrb[0].mxu0 %v494
        %v769 = vpop.f32.mrb[0].mxu0
        %v770 = vadd.f32 0.0, %v769
        %v771 = vpop.f32.mrb[0].mxu0
        %772 = vmatprep.mubr.f32.mxu0 %v497
        %773 = vmatmul.mubr.f32.gmra.mrb[0].mxu0 %v496
        %v774 = vpop.f32.mrb[0].mxu0
        %v775 = vadd.f32 0.0, %v774
        %v776 = vpop.f32.mrb[0].mxu0
        %777 = vmatprep.mubr.f32.mxu0 %v499
        %778 = vmatmul.mubr.f32.gmra.mrb[0].mxu0 %v498
        %v779 = vpop.f32.mrb[0].mxu0
        %v780 = vadd.f32 0.0, %v779
        %v781 = vpop.f32.mrb[0].mxu0
        %782 = vmatprep.mubr.f32.mxu0 %v501
        %783 = vmatmul.mubr.f32.gmra.mrb[0].mxu0 %v500
        %v784 = vpop.f32.mrb[0].mxu0
        %v785 = vadd.f32 0.0, %v784
        %v786 = vpop.f32.mrb[0].mxu0
        %787 = vmatprep.mubr.f32.mxu0 %v503
        %788 = vmatmul.mubr.f32.gmra.mrb[0].mxu0 %v502
        %v789 = vpop.f32.mrb[0].mxu0
        %v790 = vadd.f32 0.0, %v789
        %v791 = vpop.f32.mrb[0].mxu0
        %792 = vdwg.mxu0
        %v793 = vadd.f32 %v504, %v635
        %v794 = vadd.f32 %v505, %v640
        %v795 = vadd.f32 %v506, %v645
        %v796 = vadd.f32 %v507, %v650
        %v797 = vadd.f32 %v508, %v655
        %v798 = vadd.f32 %v509, %v660
        %v799 = vadd.f32 %v510, %v665
        %v800 = vadd.f32 %v511, %v670
        %v801 = vadd.f32 %v512, %v675
        %v802 = vadd.f32 %v513, %v680
        %v803 = vadd.f32 %v514, %v685
        %v804 = vadd.f32 %v515, %v690
        %v805 = vadd.f32 %v516, %v695
        %v806 = vadd.f32 %v517, %v700
        %v807 = vadd.f32 %v518, %v705
        %v808 = vadd.f32 %v519, %v710
        %v809 = vadd.f32 %v520, %v715
        %v810 = vadd.f32 %v521, %v720
        %v811 = vadd.f32 %v522, %v725
        %v812 = vadd.f32 %v523, %v730
        %v813 = vadd.f32 %v524, %v735
        %v814 = vadd.f32 %v525, %v740
        %v815 = vadd.f32 %v526, %v745
        %v816 = vadd.f32 %v527, %v750
        %v817 = vadd.f32 %v528, %v755
        %v818 = vadd.f32 %v529, %v760
        %v819 = vadd.f32 %v530, %v765
        %v820 = vadd.f32 %v531, %v770
        %v821 = vadd.f32 %v532, %v775
        %v822 = vadd.f32 %v533, %v780
        %v823 = vadd.f32 %v534, %v785
        %v824 = vadd.f32 %v535, %v790
        %825 = vst [vmem:[#allocation2] sm:$0xff] %v793
        %826 = vst [vmem:[#allocation2 + $0x8] sm:$0xff] %v794
        %827 = vst [vmem:[#allocation2 + $0x10] sm:$0xff] %v795
        %828 = vst [vmem:[#allocation2 + $0x18] sm:$0xff] %v796
        %829 = vst [vmem:[#allocation2 + $0x20] sm:$0xff] %v797
        %830 = vst [vmem:[#allocation2 + $0x28] sm:$0xff] %v798
        %831 = vst [vmem:[#allocation2 + $0x30] sm:$0xff] %v799
        %832 = vst [vmem:[#allocation2 + $0x38] sm:$0xff] %v800
        %833 = vst [vmem:[#allocation2 + $0x40] sm:$0xff] %v801
        %834 = vst [vmem:[#allocation2 + $0x48] sm:$0xff] %v802
        %835 = vst [vmem:[#allocation2 + $0x50] sm:$0xff] %v803
        %836 = vst [vmem:[#allocation2 + $0x58] sm:$0xff] %v804
        %837 = vst [vmem:[#allocation2 + $0x60] sm:$0xff] %v805
        %838 = vst [vmem:[#allocation2 + $0x68] sm:$0xff] %v806
        %839 = vst [vmem:[#allocation2 + $0x70] sm:$0xff] %v807
        %840 = vst [vmem:[#allocation2 + $0x78] sm:$0xff] %v808
        %841 = vst [vmem:[#allocation2 + $0x80] sm:$0xff] %v809
        %842 = vst [vmem:[#allocation2 + $0x88] sm:$0xff] %v810
        %843 = vst [vmem:[#allocation2 + $0x90] sm:$0xff] %v811
        %844 = vst [vmem:[#allocation2 + $0x98] sm:$0xff] %v812
        %845 = vst [vmem:[#allocation2 + $0xa0] sm:$0xff] %v813
        %846 = vst [vmem:[#allocation2 + $0xa8] sm:$0xff] %v814
        %847 = vst [vmem:[#allocation2 + $0xb0] sm:$0xff] %v815
        %848 = vst [vmem:[#allocation2 + $0xb8] sm:$0xff] %v816
        %849 = vst [vmem:[#allocation2 + $0xc0] sm:$0xff] %v817
        %850 = vst [vmem:[#allocation2 + $0xc8] sm:$0xff] %v818
        %851 = vst [vmem:[#allocation2 + $0xd0] sm:$0xff] %v819
        %852 = vst [vmem:[#allocation2 + $0xd8] sm:$0xff] %v820
        %853 = vst [vmem:[#allocation2 + $0xe0] sm:$0xff] %v821
        %854 = vst [vmem:[#allocation2 + $0xe8] sm:$0xff] %v822
        %855 = vst [vmem:[#allocation2 + $0xf0] sm:$0xff] %v823
        %856 = vst [vmem:[#allocation2 + $0xf8] sm:$0xff] %v824
        %p857 = scmp.eq.s32.totalorder %s19, 1
        // Predicated region
        $region75: #{net_forward.3} parent=65 // pred_check
          %p858 = pneg %p857
        $region76: #{net_forward.3} parent=65 // pred_check_branch
          %860 = sbr.rel (%p858) target = $region78
        $region77: #{net_forward.3} parent=65 // pred_region
          %v861 = vld [vmem:[#allocation2] sm:$0xff]
          %v862 = vld [vmem:[#allocation2 + $0x8] sm:$0xff]
          %v863 = vld [vmem:[#allocation2 + $0x10] sm:$0xff]
          %v864 = vld [vmem:[#allocation2 + $0x18] sm:$0xff]
          %v865 = vld [vmem:[#allocation2 + $0x20] sm:$0xff]
          %v866 = vld [vmem:[#allocation2 + $0x28] sm:$0xff]
          %v867 = vld [vmem:[#allocation2 + $0x30] sm:$0xff]
          %v868 = vld [vmem:[#allocation2 + $0x38] sm:$0xff]
          %v869 = vld [vmem:[#allocation2 + $0x40] sm:$0xff]
          %v870 = vld [vmem:[#allocation2 + $0x48] sm:$0xff]
          %v871 = vld [vmem:[#allocation2 + $0x50] sm:$0xff]
          %v872 = vld [vmem:[#allocation2 + $0x58] sm:$0xff]
          %v873 = vld [vmem:[#allocation2 + $0x60] sm:$0xff]
          %v874 = vld [vmem:[#allocation2 + $0x68] sm:$0xff]
          %v875 = vld [vmem:[#allocation2 + $0x70] sm:$0xff]
          %v876 = vld [vmem:[#allocation2 + $0x78] sm:$0xff]
          %v877 = vld [vmem:[#allocation2 + $0x80] sm:$0xff]
          %v878 = vld [vmem:[#allocation2 + $0x88] sm:$0xff]
          %v879 = vld [vmem:[#allocation2 + $0x90] sm:$0xff]
          %v880 = vld [vmem:[#allocation2 + $0x98] sm:$0xff]
          %v881 = vld [vmem:[#allocation2 + $0xa0] sm:$0xff]
          %v882 = vld [vmem:[#allocation2 + $0xa8] sm:$0xff]
          %v883 = vld [vmem:[#allocation2 + $0xb0] sm:$0xff]
          %v884 = vld [vmem:[#allocation2 + $0xb8] sm:$0xff]
          %v885 = vld [vmem:[#allocation2 + $0xc0] sm:$0xff]
          %v886 = vld [vmem:[#allocation2 + $0xc8] sm:$0xff]
          %v887 = vld [vmem:[#allocation2 + $0xd0] sm:$0xff]
          %v888 = vld [vmem:[#allocation2 + $0xd8] sm:$0xff]
          %v889 = vld [vmem:[#allocation2 + $0xe0] sm:$0xff]
          %v890 = vld [vmem:[#allocation2 + $0xe8] sm:$0xff]
          %v891 = vld [vmem:[#allocation2 + $0xf0] sm:$0xff]
          %v892 = vld [vmem:[#allocation2 + $0xf8] sm:$0xff]
          %v893 = vld [vmem:[%s2] sm:$0x1]
          %v895 = vlaneseq
          %v896 = vshrl.u32 %v895, 7
          %v897 = vsub.s32 0, %v896
          %v898 = vrot.slane %v893, %v897
          %v900 = vadd.f32 %v861, %v898
          %v901 = vadd.f32 %v862, %v898
          %v902 = vadd.f32 %v863, %v898
          %v903 = vadd.f32 %v864, %v898
          %v904 = vadd.f32 %v865, %v898
          %v905 = vadd.f32 %v866, %v898
          %v906 = vadd.f32 %v867, %v898
          %v907 = vadd.f32 %v868, %v898
          %v908 = vadd.f32 %v869, %v898
          %v909 = vadd.f32 %v870, %v898
          %v910 = vadd.f32 %v871, %v898
          %v911 = vadd.f32 %v872, %v898
          %v912 = vadd.f32 %v873, %v898
          %v913 = vadd.f32 %v874, %v898
          %v914 = vadd.f32 %v875, %v898
          %v915 = vadd.f32 %v876, %v898
          %v916 = vadd.f32 %v877, %v898
          %v917 = vadd.f32 %v878, %v898
          %v918 = vadd.f32 %v879, %v898
          %v919 = vadd.f32 %v880, %v898
          %v920 = vadd.f32 %v881, %v898
          %v921 = vadd.f32 %v882, %v898
          %v922 = vadd.f32 %v883, %v898
          %v923 = vadd.f32 %v884, %v898
          %v924 = vadd.f32 %v885, %v898
          %v925 = vadd.f32 %v886, %v898
          %v926 = vadd.f32 %v887, %v898
          %v927 = vadd.f32 %v888, %v898
          %v928 = vadd.f32 %v889, %v898
          %v929 = vadd.f32 %v890, %v898
          %v930 = vadd.f32 %v891, %v898
          %v931 = vadd.f32 %v892, %v898
          %932 = vst [vmem:[%s370] sm:$0xff] %v900
          %933 = vst [vmem:[%s370 + $0x8] sm:$0xff] %v901
          %934 = vst [vmem:[%s370 + $0x10] sm:$0xff] %v902
          %935 = vst [vmem:[%s370 + $0x18] sm:$0xff] %v903
          %936 = vst [vmem:[%s370 + $0x20] sm:$0xff] %v904
          %937 = vst [vmem:[%s370 + $0x28] sm:$0xff] %v905
          %938 = vst [vmem:[%s370 + $0x30] sm:$0xff] %v906
          %939 = vst [vmem:[%s370 + $0x38] sm:$0xff] %v907
          %940 = vst [vmem:[%s370 + $0x40] sm:$0xff] %v908
          %941 = vst [vmem:[%s370 + $0x48] sm:$0xff] %v909
          %942 = vst [vmem:[%s370 + $0x50] sm:$0xff] %v910
          %943 = vst [vmem:[%s370 + $0x58] sm:$0xff] %v911
          %944 = vst [vmem:[%s370 + $0x60] sm:$0xff] %v912
          %945 = vst [vmem:[%s370 + $0x68] sm:$0xff] %v913
          %946 = vst [vmem:[%s370 + $0x70] sm:$0xff] %v914
          %947 = vst [vmem:[%s370 + $0x78] sm:$0xff] %v915
          %948 = vst [vmem:[%s370 + $0x80] sm:$0xff] %v916
          %949 = vst [vmem:[%s370 + $0x88] sm:$0xff] %v917
          %950 = vst [vmem:[%s370 + $0x90] sm:$0xff] %v918
          %951 = vst [vmem:[%s370 + $0x98] sm:$0xff] %v919
          %952 = vst [vmem:[%s370 + $0xa0] sm:$0xff] %v920
          %953 = vst [vmem:[%s370 + $0xa8] sm:$0xff] %v921
          %954 = vst [vmem:[%s370 + $0xb0] sm:$0xff] %v922
          %955 = vst [vmem:[%s370 + $0xb8] sm:$0xff] %v923
          %956 = vst [vmem:[%s370 + $0xc0] sm:$0xff] %v924
          %957 = vst [vmem:[%s370 + $0xc8] sm:$0xff] %v925
          %958 = vst [vmem:[%s370 + $0xd0] sm:$0xff] %v926
          %959 = vst [vmem:[%s370 + $0xd8] sm:$0xff] %v927
          %960 = vst [vmem:[%s370 + $0xe0] sm:$0xff] %v928
          %961 = vst [vmem:[%s370 + $0xe8] sm:$0xff] %v929
          %962 = vst [vmem:[%s370 + $0xf0] sm:$0xff] %v930
          %963 = vst [vmem:[%s370 + $0xf8] sm:$0xff] %v931
        $region78: #{net_forward.3} parent=65 // pred_fallthru
          _
        %s964 = smul.u32 32, %s18
        %p965 = scmp.lt.s32.totalorder %s964, 63
        %s966 = scalar_select %p965, %s964, 63
        %s967 = smul.addr %s966, 8
        %s968 = scalar_lea.vmem %s3, %s967
        // Predicated region
        $region79: #{net_forward.3} parent=65 // pred_check
          %p969 = pneg %p119
        $region80: #{net_forward.3} parent=65 // pred_check_branch
          %971 = sbr.rel (%p969) target = $region82
        $region81: #{net_forward.3} parent=65 // pred_region
          %s972 = smul.u32 32, %s18
        $region82: #{net_forward.3} parent=65 // pred_fallthru
          _
      $region66: #{net_forward.3} parent=5 // pred_fallthru
        _
      %p973 = scmp.le.s32.totalorder 2, %s9
      // Predicated region
      $region83: #{net_forward.3} parent=5 // pred_check
        %p974 = pneg %p973
      $region84: #{net_forward.3} parent=5 // pred_check_branch
        %976 = sbr.rel (%p974) target = $region86
      $region85: #{net_forward.3} parent=5 // pred_region
        %s977 = ssub.s32 %s9, 2
        // Predicated region
        $region87: #{net_forward.3} parent=85 // pred_check
          %p978 = pneg %p125
        $region88: #{net_forward.3} parent=85 // pred_check_branch
          %980 = sbr.rel (%p978) target = $region90
        $region89: #{net_forward.3} parent=85 // pred_region
          %s981 = smul.u32 32, %s20
          %p982 = scmp.lt.s32.totalorder %s981, 63
          %s983 = scalar_select %p982, %s981, 63
          %s984 = smul.addr %s983, 8
          %s985 = scalar_lea.vmem %s3, %s984
        $region90: #{net_forward.3} parent=85 // pred_fallthru
          _
      $region86: #{net_forward.3} parent=5 // pred_fallthru
        _
    $region6: #{net_forward.3} parent=1 // loop_footer
      %s13 = sadd.s32 1, %s9
    $region7: #{net_forward.3} parent=1 // loop_footer_branch
      %8 = sbr.rel target = $region3
    $region8: #{net_forward.3} parent=1 // loop_exit
      _

</llo_original>
